<compile_context>
chip_gen: v5e
topology: v5e:2x2
jax: 0.10.0
libtpu: 0.0.40
codegen_flags: <defaults>
</compile_context>

<pallas_src>
import functools

import jax
import jax.numpy as jnp
from jax.experimental import pallas as pl
from jax.experimental.pallas import tpu as pltpu


def _round_up(n, m):
    return ((n + m - 1) // m) * m


# ---------------- Kernel 1: streaming k-NN (fused distance tile + running top-k) ----------------
def _knn_kernel(a_ref, b_ref, idx_ref, d_scr, i_scr, *, num_nn, tp1):
    # a_ref: (1, tp2, 8) aug queries ; b_ref: (1, tp1, 8) aug candidates ; idx_ref: (1, tp2, num_nn)
    j = pl.program_id(2)

    @pl.when(j == 0)
    def _():
        d_scr[...] = jnp.full(d_scr.shape, jnp.inf, d_scr.dtype)
        i_scr[...] = jnp.zeros(i_scr.shape, i_scr.dtype)

    a = a_ref[0]                                                        # (tp2, 8) f32
    b = b_ref[0]                                                        # (tp1, 8) f32
    # aug_a @ aug_b^T = |a|^2 - 2 a.b + |b|^2  (augmentation built once in the wrapper)
    d_tile = jax.lax.dot_general(a, b, (((1,), (1,)), ((), ())),
                                 preferred_element_type=jnp.float32)   # (tp2, tp1)
    tp2 = d_tile.shape[0]
    lane = jax.lax.broadcasted_iota(jnp.int32, (tp2, tp1), 1)
    base = j * tp1

    # num_nn smallest entries of this tile (ascending distance, lowest-index tie-break).
    tile_d, tile_i = [], []
    d_work = d_tile
    for _ in range(num_nn):
        m = jnp.min(d_work, axis=1, keepdims=True)                                   # (tp2, 1)
        pos = jnp.min(jnp.where(d_work == m, lane, tp1), axis=1, keepdims=True)      # first argmin
        tile_d.append(m)
        tile_i.append(pos + base)
        d_work = jnp.where(lane == pos, jnp.inf, d_work)
    tile_d = jnp.concatenate(tile_d, axis=1)                            # (tp2, num_nn)
    tile_i = jnp.concatenate(tile_i, axis=1)                            # (tp2, num_nn) int32

    # Merge with the running best-so-far (tiny: 2*num_nn lanes), keep num_nn smallest, sorted.
    cand_d = jnp.concatenate([d_scr[...], tile_d], axis=1)
    cand_i = jnp.concatenate([i_scr[...], tile_i], axis=1)
    lane2 = jax.lax.broadcasted_iota(jnp.int32, cand_d.shape, 1)
    new_d, new_i = [], []
    for _ in range(num_nn):
        m = jnp.min(cand_d, axis=1, keepdims=True)
        pos = jnp.min(jnp.where(cand_d == m, lane2, cand_d.shape[1]), axis=1, keepdims=True)
        hit = lane2 == pos
        new_d.append(m)
        new_i.append(jnp.sum(jnp.where(hit, cand_i, 0), axis=1, keepdims=True))
        cand_d = jnp.where(hit, jnp.inf, cand_d)
    d_scr[...] = jnp.concatenate(new_d, axis=1)
    i_scr[...] = jnp.concatenate(new_i, axis=1)

    @pl.when(j == pl.num_programs(2) - 1)
    def _():
        idx_ref[0] = i_scr[...]


def knn_indices(new_xyz, input_xyz, num_nn, *, tp2_cap=128, tp1_cap=1024, sentinel=1e30):
    """new_xyz (bs,P2,3), input_xyz (bs,P1,3) -> (bs,P2,num_nn) int32 neighbor indices."""
    bs, P2, _ = new_xyz.shape
    P1 = input_xyz.shape[1]
    assert P1 >= num_nn, "need at least num_nn candidate points"

    f32 = jnp.float32
    a = new_xyz.astype(f32)
    b = input_xyz.astype(f32)
    ra = jnp.sum(a * a, axis=2, keepdims=True)
    rb = jnp.sum(b * b, axis=2, keepdims=True)
    # aug_a = [x, y, z, 1, |a|^2, 0, 0, 0] ; aug_b = [-2x, -2y, -2z, |b|^2, 1, 0, 0, 0]
    aug_a = jnp.concatenate([a, jnp.ones((bs, P2, 1), f32), ra, jnp.zeros((bs, P2, 3), f32)], axis=2)
    aug_b = jnp.concatenate([-2.0 * b, rb, jnp.ones((bs, P1, 1), f32),
                             jnp.zeros((bs, P1, 3), f32)], axis=2)

    # Pad to tile multiples (no full-dim fallback). Sentinel candidate rows get a huge distance,
    # so they can never enter the top-k as long as P1 >= num_nn real points exist.
    tp2 = min(tp2_cap, _round_up(P2, 8))
    tp1 = min(tp1_cap, _round_up(P1, 128))
    P2p = _round_up(P2, tp2)
    # Ensure >=2 parallel grid steps where possible (v7x has 2 TensorCores).
    if bs * (P2p // tp2) < 2 and tp2 > 8:
        tp2 = max(8, _round_up(tp2 // 2, 8))
        P2p = _round_up(P2, tp2)
    P1p = _round_up(P1, tp1)
    if P2p != P2:
        aug_a = jnp.pad(aug_a, ((0, 0), (0, P2p - P2), (0, 0)))
    if P1p != P1:
        pad_b = jnp.zeros((bs, P1p - P1, 8), f32).at[:, :, 3].set(sentinel)
        aug_b = jnp.concatenate([aug_b, pad_b], axis=1)

    idx = pl.pallas_call(
        functools.partial(_knn_kernel, num_nn=num_nn, tp1=tp1),
        out_shape=jax.ShapeDtypeStruct((bs, P2p, num_nn), jnp.int32),
        grid=(bs, P2p // tp2, P1p // tp1),
        in_specs=[pl.BlockSpec((1, tp2, 8), lambda bb, i, j: (bb, i, 0)),
                  pl.BlockSpec((1, tp1, 8), lambda bb, i, j: (bb, j, 0))],
        out_specs=pl.BlockSpec((1, tp2, num_nn), lambda bb, i, j: (bb, i, 0)),
        scratch_shapes=[pltpu.VMEM((tp2, num_nn), jnp.float32),
                        pltpu.VMEM((tp2, num_nn), jnp.int32)],
        compiler_params=pltpu.CompilerParams(
            dimension_semantics=("parallel", "parallel", "arbitrary")),
    )(aug_a, aug_b)
    return idx[:, :P2]


# ---------------- Kernel 2: fused (1x1 conv + BN + bias) x3 + ReLU, max over num_nn neighbors ----
def _mlp_pool_kernel(x_ref, w1_ref, w2_ref, w3_ref, o_ref, *, num_nn):
    # x_ref: (TG*num_nn, cin+1) bf16 -- last lane is the constant 1 that carries the biases.
    x = x_ref[...]
    h = jnp.maximum(jnp.dot(x, w1_ref[...], preferred_element_type=jnp.float32), 0.0)
    h = jnp.maximum(jnp.dot(h.astype(jnp.bfloat16), w2_ref[...],
                            preferred_element_type=jnp.float32), 0.0)
    h = jnp.maximum(jnp.dot(h.astype(jnp.bfloat16), w3_ref[...],
                            preferred_element_type=jnp.float32), 0.0)          # (TG*nn, m3) f32
    tg, m3 = o_ref.shape
    o_ref[...] = jnp.max(h.reshape(tg, num_nn, m3), axis=1).astype(o_ref.dtype)


def mlp_maxpool(grouped, params, *, tg_cap=128, min_steps=4):
    # grouped: (G, num_nn, cin+1) bf16 (ones lane already appended), G = bs * num_sample
    G, num_nn, cin1 = grouped.shape
    w1f, w2f, w3f = params
    m3 = w3f.shape[1]

    # Group tile: multiple of 8 sublanes, sized for >= min_steps grid steps (both v7x cores
    # get work) and capped so the slab (x2 pipeline buffers) stays small in VMEM.
    TG = _round_up(max(1, -(-G // min_steps)), 8)
    TG = max(8, min(TG, tg_cap))
    G_pad = _round_up(G, TG)
    if G_pad != G:
        grouped = jnp.pad(grouped, ((0, G_pad - G), (0, 0), (0, 0)))
    x2d = grouped.reshape(G_pad * num_nn, cin1)

    out = pl.pallas_call(
        functools.partial(_mlp_pool_kernel, num_nn=num_nn),
        out_shape=jax.ShapeDtypeStruct((G_pad, m3), jnp.bfloat16),
        grid=(G_pad // TG,),
        in_specs=[
            # TODO(synk): add pipeline_mode=pl.Buffered(3) here if xprof shows exposed slab DMA (v5e).
            pl.BlockSpec((TG * num_nn, cin1), lambda g: (g, 0)),
            pl.BlockSpec(w1f.shape, lambda g: (0, 0)),
            pl.BlockSpec(w2f.shape, lambda g: (0, 0)),
            pl.BlockSpec(w3f.shape, lambda g: (0, 0)),
        ],
        out_specs=pl.BlockSpec((TG, m3), lambda g: (g, 0)),
        compiler_params=pltpu.CompilerParams(dimension_semantics=("parallel",)),
    )(x2d, w1f, w2f, w3f)
    return out[:G]


# ---------------- Parameter init (deterministic, PyTorch-like), BN + bias folded ----------------
def init_params(key, input_dim, mlp_list, eps=1e-5):
    mlp1, mlp2, mlp3 = mlp_list
    ks = jax.random.split(key, 6)

    def conv_init(kw, kb, cin, cout):
        bound = cin ** -0.5  # PyTorch Conv1d default U(-1/sqrt(cin), 1/sqrt(cin))
        w = jax.random.uniform(kw, (cin, cout), jnp.float32, -bound, bound)
        b = jax.random.uniform(kb, (cout,), jnp.float32, -bound, bound)
        return w, b

    w1, b1 = conv_init(ks[0], ks[1], input_dim, mlp1)
    w2, b2 = conv_init(ks[2], ks[3], mlp1, mlp2)
    w3, b3 = conv_init(ks[4], ks[5], mlp2, mlp3)
    # Eval-mode BatchNorm1d with default stats (gamma=1, beta=0, mean=0, var=1): y = conv(x)/sqrt(1+eps)
    scale = 1.0 / jnp.sqrt(jnp.float32(1.0 + eps))

    def fold(w, b, extra_ones_col):
        cin, cout = w.shape
        wf = jnp.concatenate([w * scale, (b * scale)[None, :]], axis=0)       # bias as extra row
        if extra_ones_col:
            # Extra output column that regenerates the constant-1 lane for the next layer.
            col = jnp.zeros((cin + 1, 1), jnp.float32).at[cin, 0].set(1.0)
            wf = jnp.concatenate([wf, col], axis=1)
        return wf.astype(jnp.bfloat16)  # bf16 weights -> bf16 activations on the MXU, f32 accum

    return (fold(w1, b1, True),   # (input_dim+1, mlp1+1)
            fold(w2, b2, True),   # (mlp1+1,      mlp2+1)
            fold(w3, b3, False))  # (mlp2+1,      mlp3)


# ---------------- Full SA_module forward (grouping_all=False, use_FPS=False path) ---------------
def sa_module_forward(input_xyz, input_feature, params, num_sample, num_nn, sample_key):
    """
    input_xyz:     (bs, P1, 3)
    input_feature: (bs, P1, C1)
    returns: nn_indices (bs, P2, num_nn), new_xyz (bs, P2, 3), new_feature (bs, P2, mlp3)
    """
    bs, P1, C1 = input_feature.shape

    # random_sample: per-batch random permutation, take first num_sample points.
    # TODO(synk): matches torch.randperm sampling semantics but not its RNG stream.
    keys = jax.random.split(sample_key, bs)
    idx_sample = jax.vmap(lambda k: jax.random.permutation(k, P1)[:num_sample])(keys)   # (bs, P2)
    new_xyz = jnp.take_along_axis(
        input_xyz, jnp.broadcast_to(idx_sample[:, :, None], (bs, num_sample, 3)), axis=1)

    # Streaming k-NN: distance tiles + running top-k fully inside the Pallas kernel.
    nn_indices = knn_indices(new_xyz, input_xyz, num_nn)                                # (bs,P2,nn)

    # Neighbor gather + centering + [feature | xyz | 1] concat (XLA).
    # TODO(synk): could be fused into the MLP kernel (scalar-prefetched nn_indices + DMA row
    # gather from HBM refs) to avoid round-tripping `grouped` through HBM; left in XLA for now.
    flat_idx = nn_indices.reshape(bs, num_sample * num_nn)
    knn_xyz = jnp.take_along_axis(
        input_xyz, jnp.broadcast_to(flat_idx[:, :, None], (bs, num_sample * num_nn, 3)), axis=1)
    knn_xyz = knn_xyz.reshape(bs, num_sample, num_nn, 3) - new_xyz[:, :, None, :]
    grouped_feat = jnp.take_along_axis(
        input_feature, jnp.broadcast_to(flat_idx[:, :, None], (bs, num_sample * num_nn, C1)), axis=1)
    grouped_feat = grouped_feat.reshape(bs, num_sample, num_nn, C1)
    ones = jnp.ones((bs, num_sample, num_nn, 1), jnp.float32)                            # bias lane
    grouped = jnp.concatenate([grouped_feat, knn_xyz, ones], axis=3).astype(jnp.bfloat16)

    # Fused MLP (1x1 convs + folded BN/bias + ReLU) + max-pool over neighbors.
    pooled = mlp_maxpool(grouped.reshape(bs * num_sample, num_nn, C1 + 4), params)       # bf16
    new_feature = pooled.astype(jnp.float32).reshape(bs, num_sample, -1)

    return nn_indices, new_xyz, new_feature


if __name__ == "__main__":
    bs, P1, C1 = 2, 64, 4
    num_sample, num_nn = 8, 8
    mlp_list = (16, 16, 32)
    input_dim = C1 + 3  # grouped features are [feature, centered xyz]; bias lane added internally

    root = jax.random.PRNGKey(0)
    k_xyz, k_feat, k_param, k_sample = jax.random.split(root, 4)
    input_xyz = jax.random.normal(k_xyz, (bs, P1, 3), jnp.float32)
    input_feature = jax.random.normal(k_feat, (bs, P1, C1), jnp.float32)
    params = init_params(k_param, input_dim, mlp_list)

    nn_indices, new_xyz, new_feature = sa_module_forward(
        input_xyz, input_feature, params, num_sample, num_nn, k_sample)
    jax.block_until_ready((nn_indices, new_xyz, new_feature))

    assert nn_indices.shape == (bs, num_sample, num_nn)
    assert new_xyz.shape == (bs, num_sample, 3)
    assert new_feature.shape == (bs, num_sample, mlp_list[2])
    assert bool(jnp.all(jnp.isfinite(new_feature)))

    # -------- reference checks (plain JAX) --------
    # k-NN: distances of the kernel-selected neighbors must equal top-k of the dense matrix.
    D = (jnp.sum(new_xyz ** 2, -1)[:, :, None]
         - 2.0 * jnp.einsum("bpc,bqc->bpq", new_xyz, input_xyz)
         + jnp.sum(input_xyz ** 2, -1)[:, None, :])
    d_sel = jnp.take_along_axis(D, nn_indices, axis=2)
    d_ref = -jax.lax.top_k(-D, num_nn)[0]
    assert bool(jnp.allclose(jnp.sort(d_sel, axis=-1), d_ref, rtol=1e-3, atol=1e-3))

    # MLP + max-pool: mirror the kernel's bf16 pipeline in plain JAX (bf16 quantization expected).
    flat_idx = nn_indices.reshape(bs, num_sample * num_nn)
    g_xyz = jnp.take_along_axis(
        input_xyz, jnp.broadcast_to(flat_idx[:, :, None], (bs, num_sample * num_nn, 3)), axis=1)
    g_xyz = g_xyz.reshape(bs, num_sample, num_nn, 3) - new_xyz[:, :, None, :]
    g_feat = jnp.take_along_axis(
        input_feature, jnp.broadcast_to(flat_idx[:, :, None], (bs, num_sample * num_nn, C1)),
        axis=1).reshape(bs, num_sample, num_nn, C1)
    x = jnp.concatenate([g_feat, g_xyz, jnp.ones((bs, num_sample, num_nn, 1), jnp.float32)], axis=3)
    x = x.astype(jnp.bfloat16).astype(jnp.float32).reshape(-1, C1 + 4)
    w1f, w2f, w3f = [w.astype(jnp.float32) for w in params]
    h = jnp.maximum(x @ w1f, 0.0).astype(jnp.bfloat16).astype(jnp.float32)
    h = jnp.maximum(h @ w2f, 0.0).astype(jnp.bfloat16).astype(jnp.float32)
    h = jnp.maximum(h @ w3f, 0.0)
    ref_feat = jnp.max(h.reshape(bs, num_sample, num_nn, -1), axis=2)
    assert bool(jnp.allclose(new_feature, ref_feat, rtol=3e-2, atol=3e-2))

    print("KERNEL_OK")
</pallas_src>

<mosaic_0001>
module attributes {stable_mosaic.version = 11 : i64} {
  func.func @_knn_kernel(%arg0: i32, %arg1: i32, %arg2: i32, %arg3: memref<1x8x8xf32, #tpu.memory_space<vmem>>, %arg4: memref<1x128x8xf32, #tpu.memory_space<vmem>>, %arg5: memref<1x8x8xi32, #tpu.memory_space<vmem>>, %arg6: memref<8x8xf32, #tpu.memory_space<vmem>>, %arg7: memref<8x8xi32, #tpu.memory_space<vmem>>) attributes {dimension_semantics = [#tpu.dimension_semantics<parallel>, #tpu.dimension_semantics<parallel>, #tpu.dimension_semantics<arbitrary>], iteration_bounds = array<i64: 2, 1, 1>, scalar_prefetch = 0 : i64, scratch_operands = 2 : i64, tpu.core_type = #tpu.core_type<tc>, window_params = [{transform_indices = @transform_0, window_bounds = array<i64: 1, 8, 8>}, {transform_indices = @transform_1, window_bounds = array<i64: 1, 128, 8>}, {transform_indices = @transform_2, window_bounds = array<i64: 1, 8, 8>}]} {
    %c0_i32 = arith.constant 0 : i32
    %0 = arith.cmpi eq, %arg2, %c0_i32 : i32
    %1 = arith.extui %0 : i1 to i32
    %c0_i32_0 = arith.constant 0 : i32
    %2 = arith.cmpi ne, %1, %c0_i32_0 : i32
    scf.if %2 {
      %cst_93 = arith.constant 0x7F800000 : f32
      %258 = vector.broadcast %cst_93 : f32 to vector<8x8xf32>
      %c0_94 = arith.constant 0 : index
      %c0_95 = arith.constant 0 : index
      %259 = vector.load %arg6[%c0_94, %c0_95] : memref<8x8xf32, #tpu.memory_space<vmem>>, vector<8x8xf32>
      tpu.vector_store %arg6[%c0_94, %c0_95], %258 {strides = array<i32>} : memref<8x8xf32, #tpu.memory_space<vmem>>, vector<8x8xf32>,
      %c0_i32_96 = arith.constant 0 : i32
      %260 = vector.broadcast %c0_i32_96 : i32 to vector<8x8xi32>
      %c0_97 = arith.constant 0 : index
      %c0_98 = arith.constant 0 : index
      %261 = vector.load %arg7[%c0_97, %c0_98] : memref<8x8xi32, #tpu.memory_space<vmem>>, vector<8x8xi32>
      tpu.vector_store %arg7[%c0_97, %c0_98], %260 {strides = array<i32>} : memref<8x8xi32, #tpu.memory_space<vmem>>, vector<8x8xi32>,
    } else {
    }
    %c0 = arith.constant 0 : index
    %c0_1 = arith.constant 0 : index
    %c0_2 = arith.constant 0 : index
    %3 = vector.load %arg3[%c0, %c0_1, %c0_2] : memref<1x8x8xf32, #tpu.memory_space<vmem>>, vector<1x8x8xf32>
    %4 = vector.shape_cast %3 : vector<1x8x8xf32> to vector<8x8xf32>
    %c0_3 = arith.constant 0 : index
    %c0_4 = arith.constant 0 : index
    %c0_5 = arith.constant 0 : index
    %5 = vector.load %arg4[%c0_3, %c0_4, %c0_5] : memref<1x128x8xf32, #tpu.memory_space<vmem>>, vector<1x128x8xf32>
    %6 = vector.shape_cast %5 : vector<1x128x8xf32> to vector<128x8xf32>
    %cst = arith.constant dense<0.000000e+00> : vector<8x128xf32>
    %7 = tpu.matmul %4, %6, %cst {dimension_numbers = #tpu.dot_dimension_numbers<[1], [1], [0], [0], [0, 0, 1, 0], [], []>} : vector<8x8xf32>, vector<128x8xf32>, vector<8x128xf32> -> vector<8x128xf32>
    %8 = tpu.iota {dimensions = array<i32: 1>} : vector<8x128xi32>
    %c128_i32 = arith.constant 128 : i32
    %9 = arith.muli %arg2, %c128_i32 : i32
    %cst_6 = arith.constant dense<0x7F800000> : vector<8xf32>
    %10 = vector.multi_reduction <minimumf>, %7, %cst_6 [1] : vector<8x128xf32> to vector<8xf32>
    %11 = vector.shape_cast %10 : vector<8xf32> to vector<8x1xf32>
    %12 = vector.broadcast %11 : vector<8x1xf32> to vector<8x128xf32>
    %13 = arith.cmpf oeq, %7, %12 : vector<8x128xf32>
    %c128_i32_7 = arith.constant 128 : i32
    %14 = vector.broadcast %c128_i32_7 : i32 to vector<8x128xi32>
    %15 = arith.select %13, %8, %14 : vector<8x128xi1>, vector<8x128xi32>
    %cst_8 = arith.constant dense<2147483647> : vector<8xi32>
    %16 = vector.multi_reduction <minsi>, %15, %cst_8 [1] : vector<8x128xi32> to vector<8xi32>
    %17 = vector.shape_cast %16 : vector<8xi32> to vector<8x1xi32>
    %18 = vector.broadcast %9 : i32 to vector<8x1xi32>
    %19 = arith.addi %17, %18 : vector<8x1xi32>
    %20 = vector.broadcast %17 : vector<8x1xi32> to vector<8x128xi32>
    %21 = arith.cmpi eq, %8, %20 : vector<8x128xi32>
    %cst_9 = arith.constant 0x7F800000 : f32
    %22 = vector.broadcast %cst_9 : f32 to vector<8x128xf32>
    %23 = arith.select %21, %22, %7 : vector<8x128xi1>, vector<8x128xf32>
    %cst_10 = arith.constant dense<0x7F800000> : vector<8xf32>
    %24 = vector.multi_reduction <minimumf>, %23, %cst_10 [1] : vector<8x128xf32> to vector<8xf32>
    %25 = vector.shape_cast %24 : vector<8xf32> to vector<8x1xf32>
    %26 = vector.broadcast %25 : vector<8x1xf32> to vector<8x128xf32>
    %27 = arith.cmpf oeq, %23, %26 : vector<8x128xf32>
    %c128_i32_11 = arith.constant 128 : i32
    %28 = vector.broadcast %c128_i32_11 : i32 to vector<8x128xi32>
    %29 = arith.select %27, %8, %28 : vector<8x128xi1>, vector<8x128xi32>
    %cst_12 = arith.constant dense<2147483647> : vector<8xi32>
    %30 = vector.multi_reduction <minsi>, %29, %cst_12 [1] : vector<8x128xi32> to vector<8xi32>
    %31 = vector.shape_cast %30 : vector<8xi32> to vector<8x1xi32>
    %32 = vector.broadcast %9 : i32 to vector<8x1xi32>
    %33 = arith.addi %31, %32 : vector<8x1xi32>
    %34 = vector.broadcast %31 : vector<8x1xi32> to vector<8x128xi32>
    %35 = arith.cmpi eq, %8, %34 : vector<8x128xi32>
    %cst_13 = arith.constant 0x7F800000 : f32
    %36 = vector.broadcast %cst_13 : f32 to vector<8x128xf32>
    %37 = arith.select %35, %36, %23 : vector<8x128xi1>, vector<8x128xf32>
    %cst_14 = arith.constant dense<0x7F800000> : vector<8xf32>
    %38 = vector.multi_reduction <minimumf>, %37, %cst_14 [1] : vector<8x128xf32> to vector<8xf32>
    %39 = vector.shape_cast %38 : vector<8xf32> to vector<8x1xf32>
    %40 = vector.broadcast %39 : vector<8x1xf32> to vector<8x128xf32>
    %41 = arith.cmpf oeq, %37, %40 : vector<8x128xf32>
    %c128_i32_15 = arith.constant 128 : i32
    %42 = vector.broadcast %c128_i32_15 : i32 to vector<8x128xi32>
    %43 = arith.select %41, %8, %42 : vector<8x128xi1>, vector<8x128xi32>
    %cst_16 = arith.constant dense<2147483647> : vector<8xi32>
    %44 = vector.multi_reduction <minsi>, %43, %cst_16 [1] : vector<8x128xi32> to vector<8xi32>
    %45 = vector.shape_cast %44 : vector<8xi32> to vector<8x1xi32>
    %46 = vector.broadcast %9 : i32 to vector<8x1xi32>
    %47 = arith.addi %45, %46 : vector<8x1xi32>
    %48 = vector.broadcast %45 : vector<8x1xi32> to vector<8x128xi32>
    %49 = arith.cmpi eq, %8, %48 : vector<8x128xi32>
    %cst_17 = arith.constant 0x7F800000 : f32
    %50 = vector.broadcast %cst_17 : f32 to vector<8x128xf32>
    %51 = arith.select %49, %50, %37 : vector<8x128xi1>, vector<8x128xf32>
    %cst_18 = arith.constant dense<0x7F800000> : vector<8xf32>
    %52 = vector.multi_reduction <minimumf>, %51, %cst_18 [1] : vector<8x128xf32> to vector<8xf32>
    %53 = vector.shape_cast %52 : vector<8xf32> to vector<8x1xf32>
    %54 = vector.broadcast %53 : vector<8x1xf32> to vector<8x128xf32>
    %55 = arith.cmpf oeq, %51, %54 : vector<8x128xf32>
    %c128_i32_19 = arith.constant 128 : i32
    %56 = vector.broadcast %c128_i32_19 : i32 to vector<8x128xi32>
    %57 = arith.select %55, %8, %56 : vector<8x128xi1>, vector<8x128xi32>
    %cst_20 = arith.constant dense<2147483647> : vector<8xi32>
    %58 = vector.multi_reduction <minsi>, %57, %cst_20 [1] : vector<8x128xi32> to vector<8xi32>
    %59 = vector.shape_cast %58 : vector<8xi32> to vector<8x1xi32>
    %60 = vector.broadcast %9 : i32 to vector<8x1xi32>
    %61 = arith.addi %59, %60 : vector<8x1xi32>
    %62 = vector.broadcast %59 : vector<8x1xi32> to vector<8x128xi32>
    %63 = arith.cmpi eq, %8, %62 : vector<8x128xi32>
    %cst_21 = arith.constant 0x7F800000 : f32
    %64 = vector.broadcast %cst_21 : f32 to vector<8x128xf32>
    %65 = arith.select %63, %64, %51 : vector<8x128xi1>, vector<8x128xf32>
    %cst_22 = arith.constant dense<0x7F800000> : vector<8xf32>
    %66 = vector.multi_reduction <minimumf>, %65, %cst_22 [1] : vector<8x128xf32> to vector<8xf32>
    %67 = vector.shape_cast %66 : vector<8xf32> to vector<8x1xf32>
    %68 = vector.broadcast %67 : vector<8x1xf32> to vector<8x128xf32>
    %69 = arith.cmpf oeq, %65, %68 : vector<8x128xf32>
    %c128_i32_23 = arith.constant 128 : i32
    %70 = vector.broadcast %c128_i32_23 : i32 to vector<8x128xi32>
    %71 = arith.select %69, %8, %70 : vector<8x128xi1>, vector<8x128xi32>
    %cst_24 = arith.constant dense<2147483647> : vector<8xi32>
    %72 = vector.multi_reduction <minsi>, %71, %cst_24 [1] : vector<8x128xi32> to vector<8xi32>
    %73 = vector.shape_cast %72 : vector<8xi32> to vector<8x1xi32>
    %74 = vector.broadcast %9 : i32 to vector<8x1xi32>
    %75 = arith.addi %73, %74 : vector<8x1xi32>
    %76 = vector.broadcast %73 : vector<8x1xi32> to vector<8x128xi32>
    %77 = arith.cmpi eq, %8, %76 : vector<8x128xi32>
    %cst_25 = arith.constant 0x7F800000 : f32
    %78 = vector.broadcast %cst_25 : f32 to vector<8x128xf32>
    %79 = arith.select %77, %78, %65 : vector<8x128xi1>, vector<8x128xf32>
    %cst_26 = arith.constant dense<0x7F800000> : vector<8xf32>
    %80 = vector.multi_reduction <minimumf>, %79, %cst_26 [1] : vector<8x128xf32> to vector<8xf32>
    %81 = vector.shape_cast %80 : vector<8xf32> to vector<8x1xf32>
    %82 = vector.broadcast %81 : vector<8x1xf32> to vector<8x128xf32>
    %83 = arith.cmpf oeq, %79, %82 : vector<8x128xf32>
    %c128_i32_27 = arith.constant 128 : i32
    %84 = vector.broadcast %c128_i32_27 : i32 to vector<8x128xi32>
    %85 = arith.select %83, %8, %84 : vector<8x128xi1>, vector<8x128xi32>
    %cst_28 = arith.constant dense<2147483647> : vector<8xi32>
    %86 = vector.multi_reduction <minsi>, %85, %cst_28 [1] : vector<8x128xi32> to vector<8xi32>
    %87 = vector.shape_cast %86 : vector<8xi32> to vector<8x1xi32>
    %88 = vector.broadcast %9 : i32 to vector<8x1xi32>
    %89 = arith.addi %87, %88 : vector<8x1xi32>
    %90 = vector.broadcast %87 : vector<8x1xi32> to vector<8x128xi32>
    %91 = arith.cmpi eq, %8, %90 : vector<8x128xi32>
    %cst_29 = arith.constant 0x7F800000 : f32
    %92 = vector.broadcast %cst_29 : f32 to vector<8x128xf32>
    %93 = arith.select %91, %92, %79 : vector<8x128xi1>, vector<8x128xf32>
    %cst_30 = arith.constant dense<0x7F800000> : vector<8xf32>
    %94 = vector.multi_reduction <minimumf>, %93, %cst_30 [1] : vector<8x128xf32> to vector<8xf32>
    %95 = vector.shape_cast %94 : vector<8xf32> to vector<8x1xf32>
    %96 = vector.broadcast %95 : vector<8x1xf32> to vector<8x128xf32>
    %97 = arith.cmpf oeq, %93, %96 : vector<8x128xf32>
    %c128_i32_31 = arith.constant 128 : i32
    %98 = vector.broadcast %c128_i32_31 : i32 to vector<8x128xi32>
    %99 = arith.select %97, %8, %98 : vector<8x128xi1>, vector<8x128xi32>
    %cst_32 = arith.constant dense<2147483647> : vector<8xi32>
    %100 = vector.multi_reduction <minsi>, %99, %cst_32 [1] : vector<8x128xi32> to vector<8xi32>
    %101 = vector.shape_cast %100 : vector<8xi32> to vector<8x1xi32>
    %102 = vector.broadcast %9 : i32 to vector<8x1xi32>
    %103 = arith.addi %101, %102 : vector<8x1xi32>
    %104 = vector.broadcast %101 : vector<8x1xi32> to vector<8x128xi32>
    %105 = arith.cmpi eq, %8, %104 : vector<8x128xi32>
    %cst_33 = arith.constant 0x7F800000 : f32
    %106 = vector.broadcast %cst_33 : f32 to vector<8x128xf32>
    %107 = arith.select %105, %106, %93 : vector<8x128xi1>, vector<8x128xf32>
    %cst_34 = arith.constant dense<0x7F800000> : vector<8xf32>
    %108 = vector.multi_reduction <minimumf>, %107, %cst_34 [1] : vector<8x128xf32> to vector<8xf32>
    %109 = vector.shape_cast %108 : vector<8xf32> to vector<8x1xf32>
    %110 = vector.broadcast %109 : vector<8x1xf32> to vector<8x128xf32>
    %111 = arith.cmpf oeq, %107, %110 : vector<8x128xf32>
    %c128_i32_35 = arith.constant 128 : i32
    %112 = vector.broadcast %c128_i32_35 : i32 to vector<8x128xi32>
    %113 = arith.select %111, %8, %112 : vector<8x128xi1>, vector<8x128xi32>
    %cst_36 = arith.constant dense<2147483647> : vector<8xi32>
    %114 = vector.multi_reduction <minsi>, %113, %cst_36 [1] : vector<8x128xi32> to vector<8xi32>
    %115 = vector.shape_cast %114 : vector<8xi32> to vector<8x1xi32>
    %116 = vector.broadcast %9 : i32 to vector<8x1xi32>
    %117 = arith.addi %115, %116 : vector<8x1xi32>
    %118 = tpu.concatenate %11, %25, %39, %53, %67, %81, %95, %109 in 1 : vector<8x1xf32>, vector<8x1xf32>, vector<8x1xf32>, vector<8x1xf32>, vector<8x1xf32>, vector<8x1xf32>, vector<8x1xf32>, vector<8x1xf32> -> vector<8x8xf32>
    %119 = tpu.concatenate %19, %33, %47, %61, %75, %89, %103, %117 in 1 : vector<8x1xi32>, vector<8x1xi32>, vector<8x1xi32>, vector<8x1xi32>, vector<8x1xi32>, vector<8x1xi32>, vector<8x1xi32>, vector<8x1xi32> -> vector<8x8xi32>
    %c0_37 = arith.constant 0 : index
    %c0_38 = arith.constant 0 : index
    %120 = vector.load %arg6[%c0_37, %c0_38] : memref<8x8xf32, #tpu.memory_space<vmem>>, vector<8x8xf32>
    %121 = tpu.concatenate %120, %118 in 1 : vector<8x8xf32>, vector<8x8xf32> -> vector<8x16xf32>
    %c0_39 = arith.constant 0 : index
    %c0_40 = arith.constant 0 : index
    %122 = vector.load %arg7[%c0_39, %c0_40] : memref<8x8xi32, #tpu.memory_space<vmem>>, vector<8x8xi32>
    %123 = tpu.concatenate %122, %119 in 1 : vector<8x8xi32>, vector<8x8xi32> -> vector<8x16xi32>
    %124 = tpu.iota {dimensions = array<i32: 1>} : vector<8x16xi32>
    %cst_41 = arith.constant dense<0x7F800000> : vector<8xf32>
    %125 = vector.multi_reduction <minimumf>, %121, %cst_41 [1] : vector<8x16xf32> to vector<8xf32>
    %126 = vector.shape_cast %125 : vector<8xf32> to vector<8x1xf32>
    %127 = vector.broadcast %126 : vector<8x1xf32> to vector<8x16xf32>
    %128 = arith.cmpf oeq, %121, %127 : vector<8x16xf32>
    %c16_i32 = arith.constant 16 : i32
    %129 = vector.broadcast %c16_i32 : i32 to vector<8x16xi32>
    %130 = arith.select %128, %124, %129 : vector<8x16xi1>, vector<8x16xi32>
    %cst_42 = arith.constant dense<2147483647> : vector<8xi32>
    %131 = vector.multi_reduction <minsi>, %130, %cst_42 [1] : vector<8x16xi32> to vector<8xi32>
    %132 = vector.shape_cast %131 : vector<8xi32> to vector<8x1xi32>
    %133 = vector.broadcast %132 : vector<8x1xi32> to vector<8x16xi32>
    %134 = arith.cmpi eq, %124, %133 : vector<8x16xi32>
    %c0_i32_43 = arith.constant 0 : i32
    %135 = vector.broadcast %c0_i32_43 : i32 to vector<8x16xi32>
    %136 = arith.select %134, %123, %135 : vector<8x16xi1>, vector<8x16xi32>
    %cst_44 = arith.constant dense<0> : vector<8xi32>
    %137 = vector.multi_reduction <add>, %136, %cst_44 [1] : vector<8x16xi32> to vector<8xi32>
    %138 = vector.shape_cast %137 : vector<8xi32> to vector<8x1xi32>
    %cst_45 = arith.constant 0x7F800000 : f32
    %139 = vector.broadcast %cst_45 : f32 to vector<8x16xf32>
    %140 = arith.select %134, %139, %121 : vector<8x16xi1>, vector<8x16xf32>
    %cst_46 = arith.constant dense<0x7F800000> : vector<8xf32>
    %141 = vector.multi_reduction <minimumf>, %140, %cst_46 [1] : vector<8x16xf32> to vector<8xf32>
    %142 = vector.shape_cast %141 : vector<8xf32> to vector<8x1xf32>
    %143 = vector.broadcast %142 : vector<8x1xf32> to vector<8x16xf32>
    %144 = arith.cmpf oeq, %140, %143 : vector<8x16xf32>
    %c16_i32_47 = arith.constant 16 : i32
    %145 = vector.broadcast %c16_i32_47 : i32 to vector<8x16xi32>
    %146 = arith.select %144, %124, %145 : vector<8x16xi1>, vector<8x16xi32>
    %cst_48 = arith.constant dense<2147483647> : vector<8xi32>
    %147 = vector.multi_reduction <minsi>, %146, %cst_48 [1] : vector<8x16xi32> to vector<8xi32>
    %148 = vector.shape_cast %147 : vector<8xi32> to vector<8x1xi32>
    %149 = vector.broadcast %148 : vector<8x1xi32> to vector<8x16xi32>
    %150 = arith.cmpi eq, %124, %149 : vector<8x16xi32>
    %c0_i32_49 = arith.constant 0 : i32
    %151 = vector.broadcast %c0_i32_49 : i32 to vector<8x16xi32>
    %152 = arith.select %150, %123, %151 : vector<8x16xi1>, vector<8x16xi32>
    %cst_50 = arith.constant dense<0> : vector<8xi32>
    %153 = vector.multi_reduction <add>, %152, %cst_50 [1] : vector<8x16xi32> to vector<8xi32>
    %154 = vector.shape_cast %153 : vector<8xi32> to vector<8x1xi32>
    %cst_51 = arith.constant 0x7F800000 : f32
    %155 = vector.broadcast %cst_51 : f32 to vector<8x16xf32>
    %156 = arith.select %150, %155, %140 : vector<8x16xi1>, vector<8x16xf32>
    %cst_52 = arith.constant dense<0x7F800000> : vector<8xf32>
    %157 = vector.multi_reduction <minimumf>, %156, %cst_52 [1] : vector<8x16xf32> to vector<8xf32>
    %158 = vector.shape_cast %157 : vector<8xf32> to vector<8x1xf32>
    %159 = vector.broadcast %158 : vector<8x1xf32> to vector<8x16xf32>
    %160 = arith.cmpf oeq, %156, %159 : vector<8x16xf32>
    %c16_i32_53 = arith.constant 16 : i32
    %161 = vector.broadcast %c16_i32_53 : i32 to vector<8x16xi32>
    %162 = arith.select %160, %124, %161 : vector<8x16xi1>, vector<8x16xi32>
    %cst_54 = arith.constant dense<2147483647> : vector<8xi32>
    %163 = vector.multi_reduction <minsi>, %162, %cst_54 [1] : vector<8x16xi32> to vector<8xi32>
    %164 = vector.shape_cast %163 : vector<8xi32> to vector<8x1xi32>
    %165 = vector.broadcast %164 : vector<8x1xi32> to vector<8x16xi32>
    %166 = arith.cmpi eq, %124, %165 : vector<8x16xi32>
    %c0_i32_55 = arith.constant 0 : i32
    %167 = vector.broadcast %c0_i32_55 : i32 to vector<8x16xi32>
    %168 = arith.select %166, %123, %167 : vector<8x16xi1>, vector<8x16xi32>
    %cst_56 = arith.constant dense<0> : vector<8xi32>
    %169 = vector.multi_reduction <add>, %168, %cst_56 [1] : vector<8x16xi32> to vector<8xi32>
    %170 = vector.shape_cast %169 : vector<8xi32> to vector<8x1xi32>
    %cst_57 = arith.constant 0x7F800000 : f32
    %171 = vector.broadcast %cst_57 : f32 to vector<8x16xf32>
    %172 = arith.select %166, %171, %156 : vector<8x16xi1>, vector<8x16xf32>
    %cst_58 = arith.constant dense<0x7F800000> : vector<8xf32>
    %173 = vector.multi_reduction <minimumf>, %172, %cst_58 [1] : vector<8x16xf32> to vector<8xf32>
    %174 = vector.shape_cast %173 : vector<8xf32> to vector<8x1xf32>
    %175 = vector.broadcast %174 : vector<8x1xf32> to vector<8x16xf32>
    %176 = arith.cmpf oeq, %172, %175 : vector<8x16xf32>
    %c16_i32_59 = arith.constant 16 : i32
    %177 = vector.broadcast %c16_i32_59 : i32 to vector<8x16xi32>
    %178 = arith.select %176, %124, %177 : vector<8x16xi1>, vector<8x16xi32>
    %cst_60 = arith.constant dense<2147483647> : vector<8xi32>
    %179 = vector.multi_reduction <minsi>, %178, %cst_60 [1] : vector<8x16xi32> to vector<8xi32>
    %180 = vector.shape_cast %179 : vector<8xi32> to vector<8x1xi32>
    %181 = vector.broadcast %180 : vector<8x1xi32> to vector<8x16xi32>
    %182 = arith.cmpi eq, %124, %181 : vector<8x16xi32>
    %c0_i32_61 = arith.constant 0 : i32
    %183 = vector.broadcast %c0_i32_61 : i32 to vector<8x16xi32>
    %184 = arith.select %182, %123, %183 : vector<8x16xi1>, vector<8x16xi32>
    %cst_62 = arith.constant dense<0> : vector<8xi32>
    %185 = vector.multi_reduction <add>, %184, %cst_62 [1] : vector<8x16xi32> to vector<8xi32>
    %186 = vector.shape_cast %185 : vector<8xi32> to vector<8x1xi32>
    %cst_63 = arith.constant 0x7F800000 : f32
    %187 = vector.broadcast %cst_63 : f32 to vector<8x16xf32>
    %188 = arith.select %182, %187, %172 : vector<8x16xi1>, vector<8x16xf32>
    %cst_64 = arith.constant dense<0x7F800000> : vector<8xf32>
    %189 = vector.multi_reduction <minimumf>, %188, %cst_64 [1] : vector<8x16xf32> to vector<8xf32>
    %190 = vector.shape_cast %189 : vector<8xf32> to vector<8x1xf32>
    %191 = vector.broadcast %190 : vector<8x1xf32> to vector<8x16xf32>
    %192 = arith.cmpf oeq, %188, %191 : vector<8x16xf32>
    %c16_i32_65 = arith.constant 16 : i32
    %193 = vector.broadcast %c16_i32_65 : i32 to vector<8x16xi32>
    %194 = arith.select %192, %124, %193 : vector<8x16xi1>, vector<8x16xi32>
    %cst_66 = arith.constant dense<2147483647> : vector<8xi32>
    %195 = vector.multi_reduction <minsi>, %194, %cst_66 [1] : vector<8x16xi32> to vector<8xi32>
    %196 = vector.shape_cast %195 : vector<8xi32> to vector<8x1xi32>
    %197 = vector.broadcast %196 : vector<8x1xi32> to vector<8x16xi32>
    %198 = arith.cmpi eq, %124, %197 : vector<8x16xi32>
    %c0_i32_67 = arith.constant 0 : i32
    %199 = vector.broadcast %c0_i32_67 : i32 to vector<8x16xi32>
    %200 = arith.select %198, %123, %199 : vector<8x16xi1>, vector<8x16xi32>
    %cst_68 = arith.constant dense<0> : vector<8xi32>
    %201 = vector.multi_reduction <add>, %200, %cst_68 [1] : vector<8x16xi32> to vector<8xi32>
    %202 = vector.shape_cast %201 : vector<8xi32> to vector<8x1xi32>
    %cst_69 = arith.constant 0x7F800000 : f32
    %203 = vector.broadcast %cst_69 : f32 to vector<8x16xf32>
    %204 = arith.select %198, %203, %188 : vector<8x16xi1>, vector<8x16xf32>
    %cst_70 = arith.constant dense<0x7F800000> : vector<8xf32>
    %205 = vector.multi_reduction <minimumf>, %204, %cst_70 [1] : vector<8x16xf32> to vector<8xf32>
    %206 = vector.shape_cast %205 : vector<8xf32> to vector<8x1xf32>
    %207 = vector.broadcast %206 : vector<8x1xf32> to vector<8x16xf32>
    %208 = arith.cmpf oeq, %204, %207 : vector<8x16xf32>
    %c16_i32_71 = arith.constant 16 : i32
    %209 = vector.broadcast %c16_i32_71 : i32 to vector<8x16xi32>
    %210 = arith.select %208, %124, %209 : vector<8x16xi1>, vector<8x16xi32>
    %cst_72 = arith.constant dense<2147483647> : vector<8xi32>
    %211 = vector.multi_reduction <minsi>, %210, %cst_72 [1] : vector<8x16xi32> to vector<8xi32>
    %212 = vector.shape_cast %211 : vector<8xi32> to vector<8x1xi32>
    %213 = vector.broadcast %212 : vector<8x1xi32> to vector<8x16xi32>
    %214 = arith.cmpi eq, %124, %213 : vector<8x16xi32>
    %c0_i32_73 = arith.constant 0 : i32
    %215 = vector.broadcast %c0_i32_73 : i32 to vector<8x16xi32>
    %216 = arith.select %214, %123, %215 : vector<8x16xi1>, vector<8x16xi32>
    %cst_74 = arith.constant dense<0> : vector<8xi32>
    %217 = vector.multi_reduction <add>, %216, %cst_74 [1] : vector<8x16xi32> to vector<8xi32>
    %218 = vector.shape_cast %217 : vector<8xi32> to vector<8x1xi32>
    %cst_75 = arith.constant 0x7F800000 : f32
    %219 = vector.broadcast %cst_75 : f32 to vector<8x16xf32>
    %220 = arith.select %214, %219, %204 : vector<8x16xi1>, vector<8x16xf32>
    %cst_76 = arith.constant dense<0x7F800000> : vector<8xf32>
    %221 = vector.multi_reduction <minimumf>, %220, %cst_76 [1] : vector<8x16xf32> to vector<8xf32>
    %222 = vector.shape_cast %221 : vector<8xf32> to vector<8x1xf32>
    %223 = vector.broadcast %222 : vector<8x1xf32> to vector<8x16xf32>
    %224 = arith.cmpf oeq, %220, %223 : vector<8x16xf32>
    %c16_i32_77 = arith.constant 16 : i32
    %225 = vector.broadcast %c16_i32_77 : i32 to vector<8x16xi32>
    %226 = arith.select %224, %124, %225 : vector<8x16xi1>, vector<8x16xi32>
    %cst_78 = arith.constant dense<2147483647> : vector<8xi32>
    %227 = vector.multi_reduction <minsi>, %226, %cst_78 [1] : vector<8x16xi32> to vector<8xi32>
    %228 = vector.shape_cast %227 : vector<8xi32> to vector<8x1xi32>
    %229 = vector.broadcast %228 : vector<8x1xi32> to vector<8x16xi32>
    %230 = arith.cmpi eq, %124, %229 : vector<8x16xi32>
    %c0_i32_79 = arith.constant 0 : i32
    %231 = vector.broadcast %c0_i32_79 : i32 to vector<8x16xi32>
    %232 = arith.select %230, %123, %231 : vector<8x16xi1>, vector<8x16xi32>
    %cst_80 = arith.constant dense<0> : vector<8xi32>
    %233 = vector.multi_reduction <add>, %232, %cst_80 [1] : vector<8x16xi32> to vector<8xi32>
    %234 = vector.shape_cast %233 : vector<8xi32> to vector<8x1xi32>
    %cst_81 = arith.constant 0x7F800000 : f32
    %235 = vector.broadcast %cst_81 : f32 to vector<8x16xf32>
    %236 = arith.select %230, %235, %220 : vector<8x16xi1>, vector<8x16xf32>
    %cst_82 = arith.constant dense<0x7F800000> : vector<8xf32>
    %237 = vector.multi_reduction <minimumf>, %236, %cst_82 [1] : vector<8x16xf32> to vector<8xf32>
    %238 = vector.shape_cast %237 : vector<8xf32> to vector<8x1xf32>
    %239 = vector.broadcast %238 : vector<8x1xf32> to vector<8x16xf32>
    %240 = arith.cmpf oeq, %236, %239 : vector<8x16xf32>
    %c16_i32_83 = arith.constant 16 : i32
    %241 = vector.broadcast %c16_i32_83 : i32 to vector<8x16xi32>
    %242 = arith.select %240, %124, %241 : vector<8x16xi1>, vector<8x16xi32>
    %cst_84 = arith.constant dense<2147483647> : vector<8xi32>
    %243 = vector.multi_reduction <minsi>, %242, %cst_84 [1] : vector<8x16xi32> to vector<8xi32>
    %244 = vector.shape_cast %243 : vector<8xi32> to vector<8x1xi32>
    %245 = vector.broadcast %244 : vector<8x1xi32> to vector<8x16xi32>
    %246 = arith.cmpi eq, %124, %245 : vector<8x16xi32>
    %c0_i32_85 = arith.constant 0 : i32
    %247 = vector.broadcast %c0_i32_85 : i32 to vector<8x16xi32>
    %248 = arith.select %246, %123, %247 : vector<8x16xi1>, vector<8x16xi32>
    %cst_86 = arith.constant dense<0> : vector<8xi32>
    %249 = vector.multi_reduction <add>, %248, %cst_86 [1] : vector<8x16xi32> to vector<8xi32>
    %250 = vector.shape_cast %249 : vector<8xi32> to vector<8x1xi32>
    %251 = tpu.concatenate %126, %142, %158, %174, %190, %206, %222, %238 in 1 : vector<8x1xf32>, vector<8x1xf32>, vector<8x1xf32>, vector<8x1xf32>, vector<8x1xf32>, vector<8x1xf32>, vector<8x1xf32>, vector<8x1xf32> -> vector<8x8xf32>
    %c0_87 = arith.constant 0 : index
    %c0_88 = arith.constant 0 : index
    %252 = vector.load %arg6[%c0_87, %c0_88] : memref<8x8xf32, #tpu.memory_space<vmem>>, vector<8x8xf32>
    tpu.vector_store %arg6[%c0_87, %c0_88], %251 {strides = array<i32>} : memref<8x8xf32, #tpu.memory_space<vmem>>, vector<8x8xf32>,
    %253 = tpu.concatenate %138, %154, %170, %186, %202, %218, %234, %250 in 1 : vector<8x1xi32>, vector<8x1xi32>, vector<8x1xi32>, vector<8x1xi32>, vector<8x1xi32>, vector<8x1xi32>, vector<8x1xi32>, vector<8x1xi32> -> vector<8x8xi32>
    %c0_89 = arith.constant 0 : index
    %c0_90 = arith.constant 0 : index
    %254 = vector.load %arg7[%c0_89, %c0_90] : memref<8x8xi32, #tpu.memory_space<vmem>>, vector<8x8xi32>
    tpu.vector_store %arg7[%c0_89, %c0_90], %253 {strides = array<i32>} : memref<8x8xi32, #tpu.memory_space<vmem>>, vector<8x8xi32>,
    %c0_i32_91 = arith.constant 0 : i32
    %255 = arith.cmpi eq, %arg2, %c0_i32_91 : i32
    %256 = arith.extui %255 : i1 to i32
    %c0_i32_92 = arith.constant 0 : i32
    %257 = arith.cmpi ne, %256, %c0_i32_92 : i32
    scf.if %257 {
      %c0_93 = arith.constant 0 : index
      %c0_94 = arith.constant 0 : index
      %258 = vector.load %arg7[%c0_93, %c0_94] : memref<8x8xi32, #tpu.memory_space<vmem>>, vector<8x8xi32>
      %c0_95 = arith.constant 0 : index
      %c0_96 = arith.constant 0 : index
      %c0_97 = arith.constant 0 : index
      %259 = vector.load %arg5[%c0_95, %c0_96, %c0_97] : memref<1x8x8xi32, #tpu.memory_space<vmem>>, vector<1x8x8xi32>
      %260 = vector.shape_cast %259 : vector<1x8x8xi32> to vector<8x8xi32>
      %261 = vector.shape_cast %258 : vector<8x8xi32> to vector<1x8x8xi32>
      tpu.vector_store %arg5[%c0_95, %c0_96, %c0_97], %261 {strides = array<i32>} : memref<1x8x8xi32, #tpu.memory_space<vmem>>, vector<1x8x8xi32>,
    } else {
    }
    return
  }
  func.func @transform_0(%arg0: i32, %arg1: i32, %arg2: i32) -> (i32, i32, i32) {
    %c0_i32 = arith.constant 0 : i32
    %c0_i32_0 = arith.constant 0 : i32
    return %arg0, %arg1, %c0_i32 : i32, i32, i32
  }
  func.func @transform_1(%arg0: i32, %arg1: i32, %arg2: i32) -> (i32, i32, i32) {
    %c0_i32 = arith.constant 0 : i32
    %c0_i32_0 = arith.constant 0 : i32
    return %arg0, %arg2, %c0_i32 : i32, i32, i32
  }
  func.func @transform_2(%arg0: i32, %arg1: i32, %arg2: i32) -> (i32, i32, i32) {
    %c0_i32 = arith.constant 0 : i32
    %c0_i32_0 = arith.constant 0 : i32
    return %arg0, %arg1, %c0_i32 : i32, i32, i32
  }
}

</mosaic_0001>

<llo_original>
// kernel: tpu_custom_call.1
$region0: #{tpu_custom_call.1}
  #allocation0 [shape = 'u32[]', space=smem, size = 0x4, offset = 0x4, fixed_abs, tag = 'smem constant byte address 0x4 - core index']
  #allocation1 [shape = 'u32[72,128]{1,0:T(1,128)}', space=vmem, size = 0x9000, scoped, tag = 'internal scratch']
  #allocation2 [shape = 'f32[8,8]{1,0:T(8,128)}', space=vmem, size = 0x1000, scoped, tag = 'scratch operand']
  #allocation3 [shape = 's32[8,8]{1,0:T(8,128)}', space=vmem, size = 0x1000, scoped, tag = 'scratch operand']
  %s0 = inlined_call_operand.vmem [shape: f32[2,8,8], index: 0, kind: input, shape index: {}]
  %s1 = inlined_call_operand.vmem [shape: f32[2,128,8], index: 1, kind: input, shape index: {}]
  %s2 = inlined_call_operand.hbm [shape: s32[2,8,8], index: 2, kind: output, shape index: {}]
  %s3 = sld [smem:[#allocation0]]
  $region49: #{tpu_custom_call.1} parent=0
    _
  %s5 = ssub.s32 1, %s3
  %s6 = scalar_select 0, %s5, %s3
  $region1: #{tpu_custom_call.1} parent=0
    #allocation4 [shape = 'u8[8192]{0}', space=vmem, size = 0x2000, scoped, tag = 'output window, operand 0']
    #allocation5 [shape = 's32[2]{0}', space=sflag, size = 0x8, scoped, tag = 'scoped memory for tpu_custom_call.1']
    %7 = vsyncpa [#allocation5], 0
    %s8 = scalar_lea.sflag [#allocation5], 1
    %9 = vsyncpa %s8, 0
    loop: start=0, step=1, limit=4
    $region2: #{tpu_custom_call.1} parent=1 // loop_pre_header
      _
    $region3: #{tpu_custom_call.1} parent=1 // loop_header
      %s11 = sphi 0, %s15
      %p12 = scmp.ge.s32.totalorder %s11, 4
      %s18 = sphi 0, %s37
      %s19 = sphi 0, %s33
      %s20 = sphi 0, %s29
      %s21 = sphi 0, %s18
      %s22 = sphi 0, %s19
      %s23 = sphi 0, %s20
      %s24 = sphi 0, %s21
      %s25 = sphi 0, %s22
      %s26 = sphi 0, %s23
      %s42 = sphi 0, %s44
      %s45 = sphi 0, %s42
      %s46 = sphi 0, %s45
      %s62 = sphi 0, %s46
      %s70 = sphi 0, %s72
      %s73 = sphi 0, %s70
      %s74 = sphi 0, %s73
      %s90 = sphi 0, %s74
      %s98 = sphi 0, %s100
      %s101 = sphi 0, %s98
      %s102 = sphi 0, %s101
      %s118 = sphi 0, %s102
    $region4: #{tpu_custom_call.1} parent=1 // loop_header_branch
      %14 = sbr.rel (%p12) target = $region8
    $region5: #{tpu_custom_call.1} parent=1 // loop_body
      %s16 = ssub.s32 %s11, 1
      %s17 = ssub.s32 %s11, 2
      %s27 = sadd.s32 1, %s20
      %p28 = scmp.ge.s32.totalorder %s27, 1
      %s29 = scalar_select %p28, 0, %s27
      %s30 = sadd.s32 1, %s19
      %s31 = scalar_select %p28, %s30, %s19
      %p32 = scmp.ge.s32.totalorder %s31, 1
      %s33 = scalar_select %p32, 0, %s31
      %s34 = sadd.s32 1, %s18
      %s35 = scalar_select %p32, %s34, %s18
      %p36 = scmp.ge.s32.totalorder %s35, 2
      %s37 = scalar_select %p36, 0, %s35
      %s38 = ssub.s32 %s18, %s37
      %s39 = ssub.s32 %s19, %s33
      %s40 = sor.u32 %s38, %s39
      %p41 = scmp.eq.s32.totalorder %s40, 0
      %s43 = sadd.s32 %s42, 1
      %s44 = scalar_select %p41, %s42, %s43
      %p47 = pneg %p41
      %p48 = scmp.eq.s32.totalorder %s11, 1
      %p49 = por %p47, %p48
      %p50 = scmp.ne.s32.totalorder %s42, %s45
      %p51 = scmp.eq.s32.totalorder %s11, 0
      %p52 = por %p50, %p51
      %p53 = scmp.ne.s32.totalorder %s42, %s45
      %p54 = scmp.eq.s32.totalorder %s16, 1
      %p55 = por %p53, %p54
      %p56 = scmp.ne.s32.totalorder %s45, %s46
      %p57 = scmp.eq.s32.totalorder %s16, 0
      %p58 = por %p56, %p57
      %p59 = scmp.ne.s32.totalorder %s45, %s46
      %p60 = scmp.eq.s32.totalorder %s17, 1
      %p61 = por %p59, %p60
      %p63 = scmp.ne.s32.totalorder %s46, %s62
      %p64 = scmp.eq.s32.totalorder %s17, 0
      %p65 = por %p63, %p64
      %s66 = ssub.s32 %s18, %s37
      %s67 = ssub.s32 %s20, %s29
      %s68 = sor.u32 %s66, %s67
      %p69 = scmp.eq.s32.totalorder %s68, 0
      %s71 = sadd.s32 %s70, 1
      %s72 = scalar_select %p69, %s70, %s71
      %p75 = pneg %p69
      %p76 = scmp.eq.s32.totalorder %s11, 1
      %p77 = por %p75, %p76
      %p78 = scmp.ne.s32.totalorder %s70, %s73
      %p79 = scmp.eq.s32.totalorder %s11, 0
      %p80 = por %p78, %p79
      %p81 = scmp.ne.s32.totalorder %s70, %s73
      %p82 = scmp.eq.s32.totalorder %s16, 1
      %p83 = por %p81, %p82
      %p84 = scmp.ne.s32.totalorder %s73, %s74
      %p85 = scmp.eq.s32.totalorder %s16, 0
      %p86 = por %p84, %p85
      %p87 = scmp.ne.s32.totalorder %s73, %s74
      %p88 = scmp.eq.s32.totalorder %s17, 1
      %p89 = por %p87, %p88
      %p91 = scmp.ne.s32.totalorder %s74, %s90
      %p92 = scmp.eq.s32.totalorder %s17, 0
      %p93 = por %p91, %p92
      %s94 = ssub.s32 %s18, %s37
      %s95 = ssub.s32 %s19, %s33
      %s96 = sor.u32 %s94, %s95
      %p97 = scmp.eq.s32.totalorder %s96, 0
      %s99 = sadd.s32 %s98, 1
      %s100 = scalar_select %p97, %s98, %s99
      %p103 = pneg %p97
      %p104 = scmp.eq.s32.totalorder %s11, 1
      %p105 = por %p103, %p104
      %p106 = scmp.ne.s32.totalorder %s98, %s101
      %p107 = scmp.eq.s32.totalorder %s11, 0
      %p108 = por %p106, %p107
      %p109 = scmp.ne.s32.totalorder %s98, %s101
      %p110 = scmp.eq.s32.totalorder %s16, 1
      %p111 = por %p109, %p110
      %p112 = scmp.ne.s32.totalorder %s101, %s102
      %p113 = scmp.eq.s32.totalorder %s16, 0
      %p114 = por %p112, %p113
      %p115 = scmp.ne.s32.totalorder %s101, %s102
      %p116 = scmp.eq.s32.totalorder %s17, 1
      %p117 = por %p115, %p116
      %p119 = scmp.ne.s32.totalorder %s102, %s118
      %p120 = scmp.eq.s32.totalorder %s17, 0
      %p121 = por %p119, %p120
      %p122 = scmp.le.s32.totalorder 1, %s11
      %p123 = scmp.lt.s32.totalorder %s11, 3
      %p124 = pnand %p122, %p123
      %p125 = pneg %p124
      // Predicated region
      $region9: #{tpu_custom_call.1} parent=5 // pred_check
        _
      $region10: #{tpu_custom_call.1} parent=5 // pred_check_branch
        %127 = sbr.rel (%p124) target = $region12
      $region11: #{tpu_custom_call.1} parent=5 // pred_region
        %s128 = ssub.s32 %s11, 1
      $region12: #{tpu_custom_call.1} parent=5 // pred_fallthru
        _
      %p129 = scmp.lt.s32.totalorder %s11, 2
      // Predicated region
      $region13: #{tpu_custom_call.1} parent=5 // pred_check
        %p130 = pneg %p129
      $region14: #{tpu_custom_call.1} parent=5 // pred_check_branch
        %132 = sbr.rel (%p130) target = $region16
      $region15: #{tpu_custom_call.1} parent=5 // pred_region
        // Predicated region
        $region17: #{tpu_custom_call.1} parent=15 // pred_check
          %p133 = pneg %p52
        $region18: #{tpu_custom_call.1} parent=15 // pred_check_branch
          %135 = sbr.rel (%p133) target = $region20
        $region19: #{tpu_custom_call.1} parent=15 // pred_region
          %p136 = scmp.lt.s32.totalorder %s18, 1
          %s137 = scalar_select %p136, %s18, 1
          %p138 = scmp.lt.s32.totalorder %s19, 0
          %s139 = scalar_select %p138, %s19, 0
          %s140 = sadd.s32 %s139, %s137
          %s141 = smul.addr %s140, 8
          %s142 = scalar_lea.vmem %s0, %s141
        $region20: #{tpu_custom_call.1} parent=15 // pred_fallthru
          _
        // Predicated region
        $region21: #{tpu_custom_call.1} parent=15 // pred_check
          %p143 = pneg %p80
        $region22: #{tpu_custom_call.1} parent=15 // pred_check_branch
          %145 = sbr.rel (%p143) target = $region24
        $region23: #{tpu_custom_call.1} parent=15 // pred_region
          %s146 = smul.u32 16, %s20
          %p147 = scmp.lt.s32.totalorder %s18, 1
          %s148 = scalar_select %p147, %s18, 1
          %p149 = scmp.lt.s32.totalorder %s146, 15
          %s150 = scalar_select %p149, %s146, 15
          %s151 = smul.addr %s148, 16
          %s152 = sadd.s32 %s150, %s151
          %s153 = smul.addr %s152, 8
          %s154 = scalar_lea.vmem %s1, %s153
          %s155 = smul.u32 16, %s20
        $region24: #{tpu_custom_call.1} parent=15 // pred_fallthru
          _
      $region16: #{tpu_custom_call.1} parent=5 // pred_fallthru
        _
      %p156 = scmp.le.s32.totalorder 1, %s11
      %p157 = scmp.lt.s32.totalorder %s11, 3
      %p158 = pnand %p156, %p157
      %p159 = pneg %p158
      // Predicated region
      $region25: #{tpu_custom_call.1} parent=5 // pred_check
        _
      $region26: #{tpu_custom_call.1} parent=5 // pred_check_branch
        %161 = sbr.rel (%p158) target = $region28
      $region27: #{tpu_custom_call.1} parent=5 // pred_region
        %s162 = ssub.s32 %s11, 1
        %p163 = scmp.lt.s32.totalorder %s21, 1
        %s164 = scalar_select %p163, %s21, 1
        %p165 = scmp.lt.s32.totalorder %s22, 0
        %s166 = scalar_select %p165, %s22, 0
        %s167 = sadd.s32 %s166, %s164
        %s168 = smul.addr %s167, 8
        %s169 = scalar_lea.vmem %s0, %s168
        %p170 = pneg %p58
        %p171 = pneg %p55
        %s172 = smul.u32 16, %s23
        %p173 = scmp.lt.s32.totalorder %s21, 1
        %s174 = scalar_select %p173, %s21, 1
        %p175 = scmp.lt.s32.totalorder %s172, 15
        %s176 = scalar_select %p175, %s172, 15
        %s177 = smul.addr %s174, 16
        %s178 = sadd.s32 %s176, %s177
        %s179 = smul.addr %s178, 8
        %s180 = scalar_lea.vmem %s1, %s179
        %p181 = pneg %p86
        %p182 = pneg %p83
        %p183 = pneg %p114
        %p184 = pneg %p111
        %s185 = sand.u32 %s101, 1
        %s186 = scalar_lea.sflag [#allocation5], %s185
        %s187 = sand.u32 %s101, 1
        %s188 = smul.addr %s187, 8
        %s189 = scalar_lea.vmem [#allocation4], %s188
        %p190 = scmp.lt.s32.totalorder %s21, 1
        %s191 = scalar_select %p190, %s21, 1
        %p192 = scmp.lt.s32.totalorder %s22, 0
        %s193 = scalar_select %p192, %s22, 0
        %s194 = sadd.s32 %s193, %s191
        %s195 = smul.addr %s194, 8
        %s196 = scalar_lea.vmem %s0, %s195
        %s197 = smul.u32 16, %s23
        %p198 = scmp.lt.s32.totalorder %s21, 1
        %s199 = scalar_select %p198, %s21, 1
        %p200 = scmp.lt.s32.totalorder %s197, 15
        %s201 = scalar_select %p200, %s197, 15
        %s202 = smul.addr %s199, 16
        %s203 = sadd.s32 %s201, %s202
        %s204 = smul.addr %s203, 8
        %s205 = scalar_lea.vmem %s1, %s204
        %s206 = smul.u32 16, %s23
        %p207 = scmp.eq.s32.totalorder %s23, 0
        // Predicated region
        $region29: #{tpu_custom_call.1} parent=27 // pred_check
          %p208 = pneg %p207
        $region30: #{tpu_custom_call.1} parent=27 // pred_check_branch
          %210 = sbr.rel (%p208) target = $region32
        $region31: #{tpu_custom_call.1} parent=27 // pred_region
          %vm211 = vcmask 64512
          %212 = vst.msk [vmem:[#allocation2] sm:$0xff] %vm211, inf
          %213 = vst.msk [vmem:[#allocation3] sm:$0xff] %vm211, 0
        $region32: #{tpu_custom_call.1} parent=27 // pred_fallthru
          _
        %v214 = vld [vmem:[%s196] sm:$0xff]
        %v215 = vld [vmem:[%s205] sm:$0xff]
        %v216 = vld [vmem:[%s205 + $0x8] sm:$0xff]
        %v217 = vld [vmem:[%s205 + $0x10] sm:$0xff]
        %v218 = vld [vmem:[%s205 + $0x18] sm:$0xff]
        %v219 = vld [vmem:[%s205 + $0x20] sm:$0xff]
        %v220 = vld [vmem:[%s205 + $0x28] sm:$0xff]
        %v221 = vld [vmem:[%s205 + $0x30] sm:$0xff]
        %v222 = vld [vmem:[%s205 + $0x38] sm:$0xff]
        %v223 = vld [vmem:[%s205 + $0x40] sm:$0xff]
        %v224 = vld [vmem:[%s205 + $0x48] sm:$0xff]
        %v225 = vld [vmem:[%s205 + $0x50] sm:$0xff]
        %v226 = vld [vmem:[%s205 + $0x58] sm:$0xff]
        %v227 = vld [vmem:[%s205 + $0x60] sm:$0xff]
        %v228 = vld [vmem:[%s205 + $0x68] sm:$0xff]
        %v229 = vld [vmem:[%s205 + $0x70] sm:$0xff]
        %v230 = vld [vmem:[%s205 + $0x78] sm:$0xff]
        %vm231 = vcmask 64512
        %v233 = vsel %vm231, %v214, 0
        %v236 = vsel %vm231, %v215, 0
        %v239 = vsel %vm231, %v216, 0
        %v242 = vsel %vm231, %v217, 0
        %v245 = vsel %vm231, %v218, 0
        %v248 = vsel %vm231, %v219, 0
        %v251 = vsel %vm231, %v220, 0
        %v254 = vsel %vm231, %v221, 0
        %v257 = vsel %vm231, %v222, 0
        %v260 = vsel %vm231, %v223, 0
        %v263 = vsel %vm231, %v224, 0
        %v266 = vsel %vm231, %v225, 0
        %v269 = vsel %vm231, %v226, 0
        %v272 = vsel %vm231, %v227, 0
        %v275 = vsel %vm231, %v228, 0
        %v278 = vsel %vm231, %v229, 0
        %v281 = vsel %vm231, %v230, 0
        %283 = vmatpush.xpose.msra.mxu0 %v281
        %284 = vmatpush.xpose.msra.mxu0 %v278
        %285 = vmatpush.xpose.msra.mxu0 %v275
        %286 = vmatpush.xpose.msra.mxu0 %v272
        %287 = vmatpush.xpose.msra.mxu0 %v269
        %288 = vmatpush.xpose.msra.mxu0 %v266
        %289 = vmatpush.xpose.msra.mxu0 %v263
        %290 = vmatpush.xpose.msra.mxu0 %v260
        %291 = vmatpush.xpose.msra.mxu0 %v257
        %292 = vmatpush.xpose.msra.mxu0 %v254
        %293 = vmatpush.xpose.msra.mxu0 %v251
        %294 = vmatpush.xpose.msra.mxu0 %v248
        %295 = vmatpush.xpose.msra.mxu0 %v245
        %296 = vmatpush.xpose.msra.mxu0 %v242
        %297 = vmatpush.xpose.msra.mxu0 %v239
        %298 = vmatpush.xpose.msra.mxu0 %v236
        %299 = vmatmul.f32.gmra.mxu0 %v233
        %v300 = vpop.f32.mrf.mxu0
        %v301 = vadd.f32 0.0, %v300
        %302 = vdwg.mxu0
        %v303 = vlaneseq
        %v304 = vand.u32 %v303, 127
        %s305 = smul.u32 %s23, 128
        %306 = vmin.xlane.f32.xlu0 %v301
        %v307 = vpop.xlane.xlu0 %306
        %vm308 = vcmp.eq.f32.partialorder %v301, %v307
        %v309 = vsel %vm308, %v304, 128
        %v310 = vand.u32 %v309, 65535
        %v311 = vshra.s32 %v309, 16
        %v312 = vcvt.s32.f32 %v310
        %v313 = vcvt.s32.f32 %v311
        %314 = vmin.xlane.f32.xlu0 %v313
        %v315 = vpop.xlane.xlu0 %314
        %vm316 = vcmp.eq.f32.partialorder %v313, %v315
        %v317 = vsel %vm316, %v312, inf
        %318 = vmin.xlane.f32.xlu0 %v317
        %v319 = vpop.xlane.xlu0 %318
        %v320 = vcvt.f32.s32 %v319
        %v321 = vcvt.f32.s32 %v315
        %v322 = vshll.u32 %v321, 16
        %v323 = vadd.s32 %v322, %v320
        %v324 = vstv %s305
        %v325 = vadd.s32 %v323, %v324
        %vm326 = vcmp.eq.s32.totalorder %v304, %v323
        %v327 = vsel %vm326, inf, %v301
        %328 = vmin.xlane.f32.xlu0 %v327
        %v329 = vpop.xlane.xlu0 %328
        %vm330 = vcmp.eq.f32.partialorder %v327, %v329
        %v331 = vsel %vm330, %v304, 128
        %v332 = vand.u32 %v331, 65535
        %v333 = vshra.s32 %v331, 16
        %v334 = vcvt.s32.f32 %v332
        %v335 = vcvt.s32.f32 %v333
        %336 = vmin.xlane.f32.xlu0 %v335
        %v337 = vpop.xlane.xlu0 %336
        %vm338 = vcmp.eq.f32.partialorder %v335, %v337
        %v339 = vsel %vm338, %v334, inf
        %340 = vmin.xlane.f32.xlu0 %v339
        %v341 = vpop.xlane.xlu0 %340
        %v342 = vcvt.f32.s32 %v341
        %v343 = vcvt.f32.s32 %v337
        %v344 = vshll.u32 %v343, 16
        %v345 = vadd.s32 %v344, %v342
        %v346 = vadd.s32 %v345, %v324
        %vm347 = vcmp.eq.s32.totalorder %v304, %v345
        %v348 = vsel %vm347, inf, %v327
        %349 = vmin.xlane.f32.xlu0 %v348
        %v350 = vpop.xlane.xlu0 %349
        %vm351 = vcmp.eq.f32.partialorder %v348, %v350
        %v352 = vsel %vm351, %v304, 128
        %v353 = vand.u32 %v352, 65535
        %v354 = vshra.s32 %v352, 16
        %v355 = vcvt.s32.f32 %v353
        %v356 = vcvt.s32.f32 %v354
        %357 = vmin.xlane.f32.xlu0 %v356
        %v358 = vpop.xlane.xlu0 %357
        %vm359 = vcmp.eq.f32.partialorder %v356, %v358
        %v360 = vsel %vm359, %v355, inf
        %361 = vmin.xlane.f32.xlu0 %v360
        %v362 = vpop.xlane.xlu0 %361
        %v363 = vcvt.f32.s32 %v362
        %v364 = vcvt.f32.s32 %v358
        %v365 = vshll.u32 %v364, 16
        %v366 = vadd.s32 %v365, %v363
        %v367 = vadd.s32 %v366, %v324
        %vm368 = vcmp.eq.s32.totalorder %v304, %v366
        %v369 = vsel %vm368, inf, %v348
        %370 = vmin.xlane.f32.xlu0 %v369
        %v371 = vpop.xlane.xlu0 %370
        %vm372 = vcmp.eq.f32.partialorder %v369, %v371
        %v373 = vsel %vm372, %v304, 128
        %v374 = vand.u32 %v373, 65535
        %v375 = vshra.s32 %v373, 16
        %v376 = vcvt.s32.f32 %v374
        %v377 = vcvt.s32.f32 %v375
        %378 = vmin.xlane.f32.xlu0 %v377
        %v379 = vpop.xlane.xlu0 %378
        %vm380 = vcmp.eq.f32.partialorder %v377, %v379
        %v381 = vsel %vm380, %v376, inf
        %382 = vmin.xlane.f32.xlu0 %v381
        %v383 = vpop.xlane.xlu0 %382
        %v384 = vcvt.f32.s32 %v383
        %v385 = vcvt.f32.s32 %v379
        %v386 = vshll.u32 %v385, 16
        %v387 = vadd.s32 %v386, %v384
        %v388 = vadd.s32 %v387, %v324
        %vm389 = vcmp.eq.s32.totalorder %v304, %v387
        %v390 = vsel %vm389, inf, %v369
        %391 = vmin.xlane.f32.xlu0 %v390
        %v392 = vpop.xlane.xlu0 %391
        %vm393 = vcmp.eq.f32.partialorder %v390, %v392
        %v394 = vsel %vm393, %v304, 128
        %v395 = vand.u32 %v394, 65535
        %v396 = vshra.s32 %v394, 16
        %v397 = vcvt.s32.f32 %v395
        %v398 = vcvt.s32.f32 %v396
        %399 = vmin.xlane.f32.xlu0 %v398
        %v400 = vpop.xlane.xlu0 %399
        %vm401 = vcmp.eq.f32.partialorder %v398, %v400
        %v402 = vsel %vm401, %v397, inf
        %403 = vmin.xlane.f32.xlu0 %v402
        %v404 = vpop.xlane.xlu0 %403
        %v405 = vcvt.f32.s32 %v404
        %v406 = vcvt.f32.s32 %v400
        %v407 = vshll.u32 %v406, 16
        %v408 = vadd.s32 %v407, %v405
        %v409 = vadd.s32 %v408, %v324
        %vm410 = vcmp.eq.s32.totalorder %v304, %v408
        %v411 = vsel %vm410, inf, %v390
        %412 = vmin.xlane.f32.xlu0 %v411
        %v413 = vpop.xlane.xlu0 %412
        %vm414 = vcmp.eq.f32.partialorder %v411, %v413
        %v415 = vsel %vm414, %v304, 128
        %v416 = vand.u32 %v415, 65535
        %v417 = vshra.s32 %v415, 16
        %v418 = vcvt.s32.f32 %v416
        %v419 = vcvt.s32.f32 %v417
        %420 = vmin.xlane.f32.xlu0 %v419
        %v421 = vpop.xlane.xlu0 %420
        %vm422 = vcmp.eq.f32.partialorder %v419, %v421
        %v423 = vsel %vm422, %v418, inf
        %424 = vmin.xlane.f32.xlu0 %v423
        %v425 = vpop.xlane.xlu0 %424
        %v426 = vcvt.f32.s32 %v425
        %v427 = vcvt.f32.s32 %v421
        %v428 = vshll.u32 %v427, 16
        %v429 = vadd.s32 %v428, %v426
        %v430 = vadd.s32 %v429, %v324
        %vm431 = vcmp.eq.s32.totalorder %v304, %v429
        %v432 = vsel %vm431, inf, %v411
        %433 = vmin.xlane.f32.xlu0 %v432
        %v434 = vpop.xlane.xlu0 %433
        %vm435 = vcmp.eq.f32.partialorder %v432, %v434
        %v436 = vsel %vm435, %v304, 128
        %v437 = vand.u32 %v436, 65535
        %v438 = vshra.s32 %v436, 16
        %v439 = vcvt.s32.f32 %v437
        %v440 = vcvt.s32.f32 %v438
        %441 = vmin.xlane.f32.xlu0 %v440
        %v442 = vpop.xlane.xlu0 %441
        %vm443 = vcmp.eq.f32.partialorder %v440, %v442
        %v444 = vsel %vm443, %v439, inf
        %445 = vmin.xlane.f32.xlu0 %v444
        %v446 = vpop.xlane.xlu0 %445
        %v447 = vcvt.f32.s32 %v446
        %v448 = vcvt.f32.s32 %v442
        %v449 = vshll.u32 %v448, 16
        %v450 = vadd.s32 %v449, %v447
        %v451 = vadd.s32 %v450, %v324
        %vm452 = vcmp.eq.s32.totalorder %v304, %v450
        %v453 = vsel %vm452, inf, %v432
        %454 = vmin.xlane.f32.xlu0 %v453
        %v455 = vpop.xlane.xlu0 %454
        %vm456 = vcmp.eq.f32.partialorder %v453, %v455
        %v457 = vsel %vm456, %v304, 128
        %v458 = vand.u32 %v457, 65535
        %v459 = vshra.s32 %v457, 16
        %v460 = vcvt.s32.f32 %v458
        %v461 = vcvt.s32.f32 %v459
        %462 = vmin.xlane.f32.xlu0 %v461
        %v463 = vpop.xlane.xlu0 %462
        %vm464 = vcmp.eq.f32.partialorder %v461, %v463
        %v465 = vsel %vm464, %v460, inf
        %466 = vmin.xlane.f32.xlu0 %v465
        %v467 = vpop.xlane.xlu0 %466
        %v468 = vcvt.f32.s32 %v467
        %v469 = vcvt.f32.s32 %v463
        %v470 = vshll.u32 %v469, 16
        %v471 = vadd.s32 %v470, %v468
        %v472 = vadd.s32 %v471, %v324
        %vm473 = vcmask 7168
        %v474 = vsel %vm473, %v307, %v329
        %vm475 = vcmask 15360
        %v476 = vsel %vm475, %v474, %v350
        %vm477 = vcmask 23552
        %v478 = vsel %vm477, %v476, %v371
        %vm479 = vcmask 31744
        %v480 = vsel %vm479, %v478, %v392
        %vm481 = vcmask 39936
        %v482 = vsel %vm481, %v480, %v413
        %vm483 = vcmask 48128
        %v484 = vsel %vm483, %v482, %v434
        %vm485 = vcmask 56320
        %v486 = vsel %vm485, %v484, %v455
        %v487 = vsel %vm473, %v325, %v346
        %v488 = vsel %vm475, %v487, %v367
        %v489 = vsel %vm477, %v488, %v388
        %v490 = vsel %vm479, %v489, %v409
        %v491 = vsel %vm481, %v490, %v430
        %v492 = vsel %vm483, %v491, %v451
        %v493 = vsel %vm485, %v492, %v472
        %v494 = vld [vmem:[#allocation2] sm:$0xff]
        %496 = vrot.lane.b32.xlu0 %v486, 8
        %v497 = vpop.permute.xlu0 %496
        %v499 = vsel %vm231, %v494, %v497
        %v500 = vld [vmem:[#allocation3] sm:$0xff]
        %501 = vrot.lane.b32.xlu0 %v493, 8
        %v502 = vpop.permute.xlu0 %501
        %v503 = vsel %vm231, %v500, %v502
        %vm504 = vcmask 130048
        %v505 = vsel %vm504, %v499, inf
        %506 = vmin.xlane.f32.xlu0 %v505
        %v507 = vpop.xlane.xlu0 %506
        %vm508 = vcmp.eq.f32.partialorder %v499, %v507
        %v509 = vsel %vm508, %v304, 16
        %v510 = vsel %vm504, %v509, 2147483647
        %v511 = vand.u32 %v510, 65535
        %v512 = vshra.s32 %v510, 16
        %v513 = vcvt.s32.f32 %v511
        %v514 = vcvt.s32.f32 %v512
        %515 = vmin.xlane.f32.xlu0 %v514
        %v516 = vpop.xlane.xlu0 %515
        %vm517 = vcmp.eq.f32.partialorder %v514, %v516
        %v518 = vsel %vm517, %v513, inf
        %519 = vmin.xlane.f32.xlu0 %v518
        %v520 = vpop.xlane.xlu0 %519
        %v521 = vcvt.f32.s32 %v520
        %v522 = vcvt.f32.s32 %v516
        %v523 = vshll.u32 %v522, 16
        %v524 = vadd.s32 %v523, %v521
        %vm525 = vcmp.eq.s32.totalorder %v304, %v524
        %v526 = vsel %vm525, %v503, 0
        %v527 = vsel %vm504, %v526, 0
        %v528 = vand.u32 %v527, 65535
        %v529 = vshrl.u32 %v527, 16
        %v530 = vcvt.s32.f32 %v528
        %v531 = vcvt.s32.f32 %v529
        %532 = vadd.xlane.f32.xlu0 %v530
        %v533 = vpop.xlane.xlu0 %532
        %534 = vadd.xlane.f32.xlu0 %v531
        %v535 = vpop.xlane.xlu0 %534
        %v536 = vcvt.f32.s32 %v533
        %v537 = vcvt.f32.s32 %v535
        %v538 = vshll.u32 %v537, 16
        %v539 = vadd.s32 %v538, %v536
        %v540 = vsel %vm525, inf, %v499
        %v541 = vsel %vm504, %v540, inf
        %542 = vmin.xlane.f32.xlu0 %v541
        %v543 = vpop.xlane.xlu0 %542
        %vm544 = vcmp.eq.f32.partialorder %v540, %v543
        %v545 = vsel %vm544, %v304, 16
        %v546 = vsel %vm504, %v545, 2147483647
        %v547 = vand.u32 %v546, 65535
        %v548 = vshra.s32 %v546, 16
        %v549 = vcvt.s32.f32 %v547
        %v550 = vcvt.s32.f32 %v548
        %551 = vmin.xlane.f32.xlu0 %v550
        %v552 = vpop.xlane.xlu0 %551
        %vm553 = vcmp.eq.f32.partialorder %v550, %v552
        %v554 = vsel %vm553, %v549, inf
        %555 = vmin.xlane.f32.xlu0 %v554
        %v556 = vpop.xlane.xlu0 %555
        %v557 = vcvt.f32.s32 %v556
        %v558 = vcvt.f32.s32 %v552
        %v559 = vshll.u32 %v558, 16
        %v560 = vadd.s32 %v559, %v557
        %vm561 = vcmp.eq.s32.totalorder %v304, %v560
        %v562 = vsel %vm561, %v503, 0
        %v563 = vsel %vm504, %v562, 0
        %v564 = vand.u32 %v563, 65535
        %v565 = vshrl.u32 %v563, 16
        %v566 = vcvt.s32.f32 %v564
        %v567 = vcvt.s32.f32 %v565
        %568 = vadd.xlane.f32.xlu0 %v566
        %v569 = vpop.xlane.xlu0 %568
        %570 = vadd.xlane.f32.xlu0 %v567
        %v571 = vpop.xlane.xlu0 %570
        %v572 = vcvt.f32.s32 %v569
        %v573 = vcvt.f32.s32 %v571
        %v574 = vshll.u32 %v573, 16
        %v575 = vadd.s32 %v574, %v572
        %v576 = vsel %vm561, inf, %v540
        %v577 = vsel %vm504, %v576, inf
        %578 = vmin.xlane.f32.xlu0 %v577
        %v579 = vpop.xlane.xlu0 %578
        %vm580 = vcmp.eq.f32.partialorder %v576, %v579
        %v581 = vsel %vm580, %v304, 16
        %v582 = vsel %vm504, %v581, 2147483647
        %v583 = vand.u32 %v582, 65535
        %v584 = vshra.s32 %v582, 16
        %v585 = vcvt.s32.f32 %v583
        %v586 = vcvt.s32.f32 %v584
        %587 = vmin.xlane.f32.xlu0 %v586
        %v588 = vpop.xlane.xlu0 %587
        %vm589 = vcmp.eq.f32.partialorder %v586, %v588
        %v590 = vsel %vm589, %v585, inf
        %591 = vmin.xlane.f32.xlu0 %v590
        %v592 = vpop.xlane.xlu0 %591
        %v593 = vcvt.f32.s32 %v592
        %v594 = vcvt.f32.s32 %v588
        %v595 = vshll.u32 %v594, 16
        %v596 = vadd.s32 %v595, %v593
        %vm597 = vcmp.eq.s32.totalorder %v304, %v596
        %v598 = vsel %vm597, %v503, 0
        %v599 = vsel %vm504, %v598, 0
        %v600 = vand.u32 %v599, 65535
        %v601 = vshrl.u32 %v599, 16
        %v602 = vcvt.s32.f32 %v600
        %v603 = vcvt.s32.f32 %v601
        %604 = vadd.xlane.f32.xlu0 %v602
        %v605 = vpop.xlane.xlu0 %604
        %606 = vadd.xlane.f32.xlu0 %v603
        %v607 = vpop.xlane.xlu0 %606
        %v608 = vcvt.f32.s32 %v605
        %v609 = vcvt.f32.s32 %v607
        %v610 = vshll.u32 %v609, 16
        %v611 = vadd.s32 %v610, %v608
        %v612 = vsel %vm597, inf, %v576
        %v613 = vsel %vm504, %v612, inf
        %614 = vmin.xlane.f32.xlu0 %v613
        %v615 = vpop.xlane.xlu0 %614
        %vm616 = vcmp.eq.f32.partialorder %v612, %v615
        %v617 = vsel %vm616, %v304, 16
        %v618 = vsel %vm504, %v617, 2147483647
        %v619 = vand.u32 %v618, 65535
        %v620 = vshra.s32 %v618, 16
        %v621 = vcvt.s32.f32 %v619
        %v622 = vcvt.s32.f32 %v620
        %623 = vmin.xlane.f32.xlu0 %v622
        %v624 = vpop.xlane.xlu0 %623
        %vm625 = vcmp.eq.f32.partialorder %v622, %v624
        %v626 = vsel %vm625, %v621, inf
        %627 = vmin.xlane.f32.xlu0 %v626
        %v628 = vpop.xlane.xlu0 %627
        %v629 = vcvt.f32.s32 %v628
        %v630 = vcvt.f32.s32 %v624
        %v631 = vshll.u32 %v630, 16
        %v632 = vadd.s32 %v631, %v629
        %vm633 = vcmp.eq.s32.totalorder %v304, %v632
        %v634 = vsel %vm633, %v503, 0
        %v635 = vsel %vm504, %v634, 0
        %v636 = vand.u32 %v635, 65535
        %v637 = vshrl.u32 %v635, 16
        %v638 = vcvt.s32.f32 %v636
        %v639 = vcvt.s32.f32 %v637
        %640 = vadd.xlane.f32.xlu0 %v638
        %v641 = vpop.xlane.xlu0 %640
        %642 = vadd.xlane.f32.xlu0 %v639
        %v643 = vpop.xlane.xlu0 %642
        %v644 = vcvt.f32.s32 %v641
        %v645 = vcvt.f32.s32 %v643
        %v646 = vshll.u32 %v645, 16
        %v647 = vadd.s32 %v646, %v644
        %v648 = vsel %vm633, inf, %v612
        %v649 = vsel %vm504, %v648, inf
        %650 = vmin.xlane.f32.xlu0 %v649
        %v651 = vpop.xlane.xlu0 %650
        %vm652 = vcmp.eq.f32.partialorder %v648, %v651
        %v653 = vsel %vm652, %v304, 16
        %v654 = vsel %vm504, %v653, 2147483647
        %v655 = vand.u32 %v654, 65535
        %v656 = vshra.s32 %v654, 16
        %v657 = vcvt.s32.f32 %v655
        %v658 = vcvt.s32.f32 %v656
        %659 = vmin.xlane.f32.xlu0 %v658
        %v660 = vpop.xlane.xlu0 %659
        %vm661 = vcmp.eq.f32.partialorder %v658, %v660
        %v662 = vsel %vm661, %v657, inf
        %663 = vmin.xlane.f32.xlu0 %v662
        %v664 = vpop.xlane.xlu0 %663
        %v665 = vcvt.f32.s32 %v664
        %v666 = vcvt.f32.s32 %v660
        %v667 = vshll.u32 %v666, 16
        %v668 = vadd.s32 %v667, %v665
        %vm669 = vcmp.eq.s32.totalorder %v304, %v668
        %v670 = vsel %vm669, %v503, 0
        %v671 = vsel %vm504, %v670, 0
        %v672 = vand.u32 %v671, 65535
        %v673 = vshrl.u32 %v671, 16
        %v674 = vcvt.s32.f32 %v672
        %v675 = vcvt.s32.f32 %v673
        %676 = vadd.xlane.f32.xlu0 %v674
        %v677 = vpop.xlane.xlu0 %676
        %678 = vadd.xlane.f32.xlu0 %v675
        %v679 = vpop.xlane.xlu0 %678
        %v680 = vcvt.f32.s32 %v677
        %v681 = vcvt.f32.s32 %v679
        %v682 = vshll.u32 %v681, 16
        %v683 = vadd.s32 %v682, %v680
        %v684 = vsel %vm669, inf, %v648
        %v685 = vsel %vm504, %v684, inf
        %686 = vmin.xlane.f32.xlu0 %v685
        %v687 = vpop.xlane.xlu0 %686
        %vm688 = vcmp.eq.f32.partialorder %v684, %v687
        %v689 = vsel %vm688, %v304, 16
        %v690 = vsel %vm504, %v689, 2147483647
        %v691 = vand.u32 %v690, 65535
        %v692 = vshra.s32 %v690, 16
        %v693 = vcvt.s32.f32 %v691
        %v694 = vcvt.s32.f32 %v692
        %695 = vmin.xlane.f32.xlu0 %v694
        %v696 = vpop.xlane.xlu0 %695
        %vm697 = vcmp.eq.f32.partialorder %v694, %v696
        %v698 = vsel %vm697, %v693, inf
        %699 = vmin.xlane.f32.xlu0 %v698
        %v700 = vpop.xlane.xlu0 %699
        %v701 = vcvt.f32.s32 %v700
        %v702 = vcvt.f32.s32 %v696
        %v703 = vshll.u32 %v702, 16
        %v704 = vadd.s32 %v703, %v701
        %vm705 = vcmp.eq.s32.totalorder %v304, %v704
        %v706 = vsel %vm705, %v503, 0
        %v707 = vsel %vm504, %v706, 0
        %v708 = vand.u32 %v707, 65535
        %v709 = vshrl.u32 %v707, 16
        %v710 = vcvt.s32.f32 %v708
        %v711 = vcvt.s32.f32 %v709
        %712 = vadd.xlane.f32.xlu0 %v710
        %v713 = vpop.xlane.xlu0 %712
        %714 = vadd.xlane.f32.xlu0 %v711
        %v715 = vpop.xlane.xlu0 %714
        %v716 = vcvt.f32.s32 %v713
        %v717 = vcvt.f32.s32 %v715
        %v718 = vshll.u32 %v717, 16
        %v719 = vadd.s32 %v718, %v716
        %v720 = vsel %vm705, inf, %v684
        %v721 = vsel %vm504, %v720, inf
        %722 = vmin.xlane.f32.xlu0 %v721
        %v723 = vpop.xlane.xlu0 %722
        %vm724 = vcmp.eq.f32.partialorder %v720, %v723
        %v725 = vsel %vm724, %v304, 16
        %v726 = vsel %vm504, %v725, 2147483647
        %v727 = vand.u32 %v726, 65535
        %v728 = vshra.s32 %v726, 16
        %v729 = vcvt.s32.f32 %v727
        %v730 = vcvt.s32.f32 %v728
        %731 = vmin.xlane.f32.xlu0 %v730
        %v732 = vpop.xlane.xlu0 %731
        %vm733 = vcmp.eq.f32.partialorder %v730, %v732
        %v734 = vsel %vm733, %v729, inf
        %735 = vmin.xlane.f32.xlu0 %v734
        %v736 = vpop.xlane.xlu0 %735
        %v737 = vcvt.f32.s32 %v736
        %v738 = vcvt.f32.s32 %v732
        %v739 = vshll.u32 %v738, 16
        %v740 = vadd.s32 %v739, %v737
        %vm741 = vcmp.eq.s32.totalorder %v304, %v740
        %v742 = vsel %vm741, %v503, 0
        %v743 = vsel %vm504, %v742, 0
        %v744 = vand.u32 %v743, 65535
        %v745 = vshrl.u32 %v743, 16
        %v746 = vcvt.s32.f32 %v744
        %v747 = vcvt.s32.f32 %v745
        %748 = vadd.xlane.f32.xlu0 %v746
        %v749 = vpop.xlane.xlu0 %748
        %750 = vadd.xlane.f32.xlu0 %v747
        %v751 = vpop.xlane.xlu0 %750
        %v752 = vcvt.f32.s32 %v749
        %v753 = vcvt.f32.s32 %v751
        %v754 = vshll.u32 %v753, 16
        %v755 = vadd.s32 %v754, %v752
        %v756 = vsel %vm741, inf, %v720
        %v757 = vsel %vm504, %v756, inf
        %758 = vmin.xlane.f32.xlu0 %v757
        %v759 = vpop.xlane.xlu0 %758
        %vm760 = vcmp.eq.f32.partialorder %v756, %v759
        %v761 = vsel %vm760, %v304, 16
        %v762 = vsel %vm504, %v761, 2147483647
        %v763 = vand.u32 %v762, 65535
        %v764 = vshra.s32 %v762, 16
        %v765 = vcvt.s32.f32 %v763
        %v766 = vcvt.s32.f32 %v764
        %767 = vmin.xlane.f32.xlu0 %v766
        %v768 = vpop.xlane.xlu0 %767
        %vm769 = vcmp.eq.f32.partialorder %v766, %v768
        %v770 = vsel %vm769, %v765, inf
        %771 = vmin.xlane.f32.xlu0 %v770
        %v772 = vpop.xlane.xlu0 %771
        %v773 = vcvt.f32.s32 %v772
        %v774 = vcvt.f32.s32 %v768
        %v775 = vshll.u32 %v774, 16
        %v776 = vadd.s32 %v775, %v773
        %vm777 = vcmp.eq.s32.totalorder %v304, %v776
        %v778 = vsel %vm777, %v503, 0
        %v779 = vsel %vm504, %v778, 0
        %v780 = vand.u32 %v779, 65535
        %v781 = vshrl.u32 %v779, 16
        %v782 = vcvt.s32.f32 %v780
        %v783 = vcvt.s32.f32 %v781
        %784 = vadd.xlane.f32.xlu0 %v782
        %v785 = vpop.xlane.xlu0 %784
        %786 = vadd.xlane.f32.xlu0 %v783
        %v787 = vpop.xlane.xlu0 %786
        %v788 = vcvt.f32.s32 %v785
        %v789 = vcvt.f32.s32 %v787
        %v790 = vshll.u32 %v789, 16
        %v791 = vadd.s32 %v790, %v788
        %v792 = vsel %vm473, %v507, %v543
        %v793 = vsel %vm475, %v792, %v579
        %v794 = vsel %vm477, %v793, %v615
        %v795 = vsel %vm479, %v794, %v651
        %v796 = vsel %vm481, %v795, %v687
        %v797 = vsel %vm483, %v796, %v723
        %v798 = vsel %vm485, %v797, %v759
        %799 = vst.msk [vmem:[#allocation2] sm:$0xff] %vm231, %v798
        %v800 = vsel %vm473, %v539, %v575
        %v801 = vsel %vm475, %v800, %v611
        %v802 = vsel %vm477, %v801, %v647
        %v803 = vsel %vm479, %v802, %v683
        %v804 = vsel %vm481, %v803, %v719
        %v805 = vsel %vm483, %v804, %v755
        %v806 = vsel %vm485, %v805, %v791
        %807 = vst.msk [vmem:[#allocation3] sm:$0xff] %vm231, %v806
        // Predicated region
        $region33: #{tpu_custom_call.1} parent=27 // pred_check
          %p808 = pneg %p207
        $region34: #{tpu_custom_call.1} parent=27 // pred_check_branch
          %810 = sbr.rel (%p808) target = $region36
        $region35: #{tpu_custom_call.1} parent=27 // pred_region
          %v811 = vld [vmem:[#allocation3] sm:$0xff]
          %812 = vst.msk [vmem:[%s189] sm:$0xff] %vm231, %v811
        $region36: #{tpu_custom_call.1} parent=27 // pred_fallthru
          _
        %s813 = sand.u32 %s101, 1
        %s814 = scalar_lea.sflag [#allocation5], %s813
        %s815 = sand.u32 %s101, 1
        %s816 = smul.addr %s815, 8
        %s817 = scalar_lea.vmem [#allocation4], %s816
        // Predicated region
        $region37: #{tpu_custom_call.1} parent=27 // pred_check
          %p818 = pneg %p111
        $region38: #{tpu_custom_call.1} parent=27 // pred_check_branch
          %820 = sbr.rel (%p818) target = $region40
        $region39: #{tpu_custom_call.1} parent=27 // pred_region
          %822 = vsyncadd %s814, 0
          %s823 = sadd.s32 %s22, %s21
          %s824 = smul.addr %s823, 8
          %s825 = scalar_lea.hbm %s2, %s824
          %s827 = sshll.u32 %s817, 4
          %s828 = int_to_ptr.vmem [resolvable:$true] %s827
          %s829 = sshll.u32 %s825, 4
          %s830 = int_to_ptr.hbm [resolvable:$true] %s829
          %832 = dma.vmem_to_hbm [thread:$0]  %s828, 128, %s830, %s814
        $region40: #{tpu_custom_call.1} parent=27 // pred_fallthru
          _
      $region28: #{tpu_custom_call.1} parent=5 // pred_fallthru
        _
      %p833 = scmp.le.s32.totalorder 2, %s11
      // Predicated region
      $region41: #{tpu_custom_call.1} parent=5 // pred_check
        %p834 = pneg %p833
      $region42: #{tpu_custom_call.1} parent=5 // pred_check_branch
        %836 = sbr.rel (%p834) target = $region44
      $region43: #{tpu_custom_call.1} parent=5 // pred_region
        %s837 = ssub.s32 %s11, 2
        // Predicated region
        $region45: #{tpu_custom_call.1} parent=43 // pred_check
          %p838 = pneg %p117
        $region46: #{tpu_custom_call.1} parent=43 // pred_check_branch
          %840 = sbr.rel (%p838) target = $region48
        $region47: #{tpu_custom_call.1} parent=43 // pred_region
          %s841 = sand.u32 %s102, 1
          %s842 = scalar_lea.sflag [#allocation5], %s841
          %s843 = sand.u32 %s102, 1
          %s844 = smul.addr %s843, 8
          %s845 = scalar_lea.vmem [#allocation4], %s844
          %847 = dma.done %s842, 128
        $region48: #{tpu_custom_call.1} parent=43 // pred_fallthru
          _
      $region44: #{tpu_custom_call.1} parent=5 // pred_fallthru
        _
    $region6: #{tpu_custom_call.1} parent=1 // loop_footer
      %s15 = sadd.s32 1, %s11
    $region7: #{tpu_custom_call.1} parent=1 // loop_footer_branch
      %10 = sbr.rel target = $region3
    $region8: #{tpu_custom_call.1} parent=1 // loop_exit
      _
    %848 = vsyncpa [#allocation5], 1
    %s849 = scalar_lea.sflag [#allocation5], 1
    %850 = vsyncpa %s849, 1

</llo_original>
